<compile_context>
chip_gen: v5e
topology: v5e:2x2
jax: 0.10.0
libtpu: 0.0.40
codegen_flags: <defaults>
</compile_context>

<pallas_src>
import math
from functools import partial

import jax
import jax.numpy as jnp
from jax import lax
from jax.experimental import pallas as pl
from jax.experimental.pallas import tpu as pltpu


# -----------------------------------------------------------------------------
# In-kernel helpers
# -----------------------------------------------------------------------------
def _gcn(adj, h, m_col, w, b):
    """relu(adj @ h @ w + b) * mask   (one graph, all values live in vregs/VMEM)."""
    ah = jnp.dot(adj, h, preferred_element_type=jnp.float32)
    y = jnp.dot(ah, w, preferred_element_type=jnp.float32) + b
    y = jnp.maximum(y, 0.0)
    return y * m_col


def _topk_selection(s_col, k):
    """Selection matrix S (k, n): S[r, i] = 1 iff node i has rank r (< k).

    Ordering matches lax.top_k (descending score, ties broken by lower index).
    Built with 2-D iotas, broadcasts and standard-form matmuls only — no
    transposes, no narrow relayouts, so it lowers cleanly in Mosaic.
    """
    n = s_col.shape[0]
    ii = lax.broadcasted_iota(jnp.int32, (n, n), 0)
    jj = lax.broadcasted_iota(jnp.int32, (n, n), 1)

    smat = jnp.broadcast_to(s_col, (n, n))                 # smat[i, j]  = s_i
    diag = jnp.where(ii == jj, smat, 0.0)                  # diag(s)
    smatT = jnp.dot(jnp.ones((n, n), jnp.float32), diag,   # smatT[i, j] = s_j
                    preferred_element_type=jnp.float32)

    # beats[i, j] = 1 iff node i outranks node j (strict >, index tie-break).
    beats = (ii != jj) & ((smat > smatT) | ((smat == smatT) & (ii < jj)))
    bf = jnp.where(beats, 1.0, 0.0)
    rank_row = jnp.sum(bf, axis=0, keepdims=True)          # (1, n): rank of node j

    r_iota = lax.broadcasted_iota(jnp.int32, (k, n), 0).astype(jnp.float32)
    return jnp.where(rank_row == r_iota, 1.0, 0.0)         # (k, n)


# -----------------------------------------------------------------------------
# Fully fused forward kernel (one graph per grid step)
# -----------------------------------------------------------------------------
def _net_fwd_kernel(adj_ref, x_ref, m_ref,
                    ew_ref, eb_ref, lw_ref, lb_ref, pp_ref,
                    w1_ref, b1_ref, w2_ref, b2_ref,
                    out_ref, *, pool_ks):
    adj = adj_ref[0]                       # (N, N)
    h = x_ref[0]                           # (N, Fin)
    m_col = m_ref[0]                       # (N, 1)

    # Initial GCN embedding.
    h = _gcn(adj, h, m_col, ew_ref[...], eb_ref[...])

    # Hierarchical GCN + MuchPool (feature top-k channel), all in VMEM.
    for lvl, k in enumerate(pool_ks):
        h = _gcn(adj, h, m_col, lw_ref[lvl], lb_ref[lvl])

        # Pooling scores (invalid nodes pushed to -1e9 so they rank last).
        s_col = jnp.dot(h, pp_ref[lvl], preferred_element_type=jnp.float32)  # (n, 1)
        s_col = jnp.where(m_col > 0.0, s_col, -1e9)

        S = _topk_selection(s_col, k)                                        # (k, n)

        top_s = jnp.dot(S, s_col, preferred_element_type=jnp.float32)        # (k, 1)
        gate = 1.0 / (1.0 + jnp.exp(-top_s))                                 # sigmoid
        h = jnp.dot(S, h, preferred_element_type=jnp.float32) * gate         # (k, Hd)

        adj_rows = jnp.dot(S, adj, preferred_element_type=jnp.float32)       # (k, n)
        adj = lax.dot_general(adj_rows, S, (((1,), (1,)), ((), ())),         # S adj S^T
                              preferred_element_type=jnp.float32)            # (k, k)
        m_col = jnp.dot(S, m_col, preferred_element_type=jnp.float32)        # (k, 1)
        # TODO(synk): structure-based / cross-channel MuchPool paths and adjacency
        # re-normalization are not in the provided source and are omitted.

    # Mean readout over pooled nodes (torch.mean(H, dim=1)), then MLP classifier.
    z = jnp.mean(h, axis=0, keepdims=True)                                   # (1, Hd)
    h1 = jnp.dot(z, w1_ref[...], preferred_element_type=jnp.float32) + b1_ref[...]
    h1 = jnp.maximum(h1, 0.0)
    logits = jnp.dot(h1, w2_ref[...], preferred_element_type=jnp.float32) + b2_ref[...]
    mx = jnp.max(logits, axis=-1, keepdims=True)
    e = jnp.exp(logits - mx)
    out_ref[0] = logits - mx - jnp.log(jnp.sum(e, axis=-1, keepdims=True))


def net_forward(xs, adjs, masks, params, pool_ks):
    B, N, Fin = xs.shape
    Hd = params["embed_w"].shape[1]
    C = params["w2"].shape[1]
    L = len(pool_ks)
    m_col = masks[..., None]                               # (B, N, 1)

    kernel = partial(_net_fwd_kernel, pool_ks=tuple(pool_ks))
    out = pl.pallas_call(
        kernel,
        out_shape=jax.ShapeDtypeStruct((B, 1, C), jnp.float32),
        grid=(B,),
        in_specs=[
            pl.BlockSpec((1, N, N), lambda i: (i, 0, 0)),      # adj
            pl.BlockSpec((1, N, Fin), lambda i: (i, 0, 0)),    # x
            pl.BlockSpec((1, N, 1), lambda i: (i, 0, 0)),      # mask (column form)
            pl.BlockSpec((Fin, Hd), lambda i: (0, 0)),         # embed W
            pl.BlockSpec((1, Hd), lambda i: (0, 0)),           # embed b
            pl.BlockSpec((L, Hd, Hd), lambda i: (0, 0, 0)),    # hierarchical Ws
            pl.BlockSpec((L, 1, Hd), lambda i: (0, 0, 0)),     # hierarchical bs
            pl.BlockSpec((L, Hd, 1), lambda i: (0, 0, 0)),     # pooling scorers
            pl.BlockSpec((Hd, Hd), lambda i: (0, 0)),          # MLP W1
            pl.BlockSpec((1, Hd), lambda i: (0, 0)),           # MLP b1
            pl.BlockSpec((Hd, C), lambda i: (0, 0)),           # MLP W2
            pl.BlockSpec((1, C), lambda i: (0, 0)),            # MLP b2
        ],
        out_specs=pl.BlockSpec((1, 1, C), lambda i: (i, 0, 0)),
        compiler_params=pltpu.CompilerParams(
            dimension_semantics=("parallel",),
            vmem_limit_bytes=64 << 20,
        ),
    )(adjs, xs, m_col,
      params["embed_w"], params["embed_b"],
      params["embeds_w"], params["embeds_b"], params["pool_p"],
      params["w1"], params["b1"], params["w2"], params["b2"])
    return out[:, 0, :]


# -----------------------------------------------------------------------------
# Pure-JAX reference (same math, used only for validation)
# -----------------------------------------------------------------------------
def _net_reference(xs, adjs, masks, params, pool_ks):
    def gcn(adj, h, m, w, b):
        y = jnp.maximum(jnp.einsum("bij,bjf->bif", adj, h) @ w + b, 0.0)
        return y * m[..., None]

    H = gcn(adjs, xs, masks, params["embed_w"], params["embed_b"])
    adj, mask = adjs, masks
    for lvl, k in enumerate(pool_ks):
        H = gcn(adj, H, mask, params["embeds_w"][lvl], params["embeds_b"][lvl])
        s = jnp.einsum("bnh,hd->bnd", H, params["pool_p"][lvl])[..., 0]
        s = jnp.where(mask > 0.0, s, -1e9)
        top_s, idx = jax.lax.top_k(s, k)
        gate = jax.nn.sigmoid(top_s)
        H = jnp.take_along_axis(H, idx[:, :, None], axis=1) * gate[:, :, None]
        rows = jnp.take_along_axis(adj, idx[:, :, None], axis=1)
        adj = jnp.take_along_axis(rows, idx[:, None, :], axis=2)
        mask = jnp.take_along_axis(mask, idx, axis=1)
    Z = jnp.mean(H, axis=1)
    h1 = jnp.maximum(Z @ params["w1"] + params["b1"], 0.0)
    logits = h1 @ params["w2"] + params["b2"]
    return jax.nn.log_softmax(logits, axis=-1)


# -----------------------------------------------------------------------------
# Main
# -----------------------------------------------------------------------------
if __name__ == "__main__":
    # args
    B, N = 2, 16
    input_dim, hidden_dim, num_class = 8, 32, 3
    hierarchical_num = 2
    pooling_ratio = 0.5
    pool_ks = []
    n_cur = N
    for _ in range(hierarchical_num):
        n_cur = max(1, int(math.ceil(pooling_ratio * n_cur)))
        pool_ks.append(n_cur)                                        # [8, 4]

    key = jax.random.PRNGKey(0)
    ks = jax.random.split(key, 16)

    params = {
        "embed_w": 0.1 * jax.random.normal(ks[0], (input_dim, hidden_dim), jnp.float32),
        "embed_b": jnp.zeros((1, hidden_dim), jnp.float32),
        "embeds_w": jnp.stack([0.1 * jax.random.normal(ks[1 + i], (hidden_dim, hidden_dim), jnp.float32)
                               for i in range(hierarchical_num)]),              # (L, Hd, Hd)
        "embeds_b": jnp.zeros((hierarchical_num, 1, hidden_dim), jnp.float32),  # (L, 1, Hd)
        "pool_p": jnp.stack([0.1 * jax.random.normal(ks[4 + i], (hidden_dim, 1), jnp.float32)
                             for i in range(hierarchical_num)]),                # (L, Hd, 1)
        "w1": 0.1 * jax.random.normal(ks[8], (hidden_dim, hidden_dim), jnp.float32),
        "b1": jnp.zeros((1, hidden_dim), jnp.float32),
        "w2": 0.1 * jax.random.normal(ks[9], (hidden_dim, num_class), jnp.float32),
        "b2": jnp.zeros((1, num_class), jnp.float32),
    }

    # Deterministic inputs: batched padded graphs.
    xs = jax.random.normal(ks[10], (B, N, input_dim), jnp.float32)
    n_valid = jnp.array([14, 12], jnp.int32)
    masks = (jnp.arange(N)[None, :] < n_valid[:, None]).astype(jnp.float32)   # (B, N)

    raw = (jax.random.uniform(ks[11], (B, N, N)) > 0.6).astype(jnp.float32)
    adj = jnp.maximum(raw, jnp.transpose(raw, (0, 2, 1)))                     # symmetric
    adj = adj + jnp.eye(N, dtype=jnp.float32)[None]                           # self-loops
    adj = adj * masks[:, :, None] * masks[:, None, :]                         # zero padded rows/cols
    deg = jnp.clip(jnp.sum(adj, axis=-1, keepdims=True), 1.0, None)
    adjs = adj / deg                                                          # row-normalized

    fwd = jax.jit(partial(net_forward, pool_ks=tuple(pool_ks)))
    logits = fwd(xs, adjs, masks, params)
    jax.block_until_ready(logits)

    ref = _net_reference(xs, adjs, masks, params, pool_ks)
    assert logits.shape == (B, num_class)
    assert bool(jnp.all(jnp.isfinite(logits)))
    assert bool(jnp.allclose(logits, ref, atol=2e-3, rtol=2e-3)), "mismatch vs JAX reference"
    print("KERNEL_OK")
</pallas_src>

<mosaic_0001>
module attributes {stable_mosaic.version = 11 : i64} {
  func.func @_net_fwd_kernel(%arg0: i32, %arg1: memref<1x16x16xf32, #tpu.memory_space<vmem>>, %arg2: memref<1x16x8xf32, #tpu.memory_space<vmem>>, %arg3: memref<1x16x1xf32, #tpu.memory_space<vmem>>, %arg4: memref<8x32xf32, #tpu.memory_space<vmem>>, %arg5: memref<1x32xf32, #tpu.memory_space<vmem>>, %arg6: memref<2x32x32xf32, #tpu.memory_space<vmem>>, %arg7: memref<2x1x32xf32, #tpu.memory_space<vmem>>, %arg8: memref<2x32x1xf32, #tpu.memory_space<vmem>>, %arg9: memref<32x32xf32, #tpu.memory_space<vmem>>, %arg10: memref<1x32xf32, #tpu.memory_space<vmem>>, %arg11: memref<32x3xf32, #tpu.memory_space<vmem>>, %arg12: memref<1x3xf32, #tpu.memory_space<vmem>>, %arg13: memref<1x1x3xf32, #tpu.memory_space<vmem>>) attributes {dimension_semantics = [#tpu.dimension_semantics<parallel>], iteration_bounds = array<i64: 2>, scalar_prefetch = 0 : i64, scratch_operands = 0 : i64, tpu.core_type = #tpu.core_type<tc>, window_params = [{transform_indices = @transform_0, window_bounds = array<i64: 1, 16, 16>}, {transform_indices = @transform_1, window_bounds = array<i64: 1, 16, 8>}, {transform_indices = @transform_2, window_bounds = array<i64: 1, 16, 1>}, {pipeline_mode = #tpu.pipeline_mode<synchronous>, transform_indices = @transform_3, window_bounds = array<i64: 8, 32>}, {pipeline_mode = #tpu.pipeline_mode<synchronous>, transform_indices = @transform_4, window_bounds = array<i64: 1, 32>}, {pipeline_mode = #tpu.pipeline_mode<synchronous>, transform_indices = @transform_5, window_bounds = array<i64: 2, 32, 32>}, {pipeline_mode = #tpu.pipeline_mode<synchronous>, transform_indices = @transform_6, window_bounds = array<i64: 2, 1, 32>}, {pipeline_mode = #tpu.pipeline_mode<synchronous>, transform_indices = @transform_7, window_bounds = array<i64: 2, 32, 1>}, {pipeline_mode = #tpu.pipeline_mode<synchronous>, transform_indices = @transform_8, window_bounds = array<i64: 32, 32>}, {pipeline_mode = #tpu.pipeline_mode<synchronous>, transform_indices = @transform_9, window_bounds = array<i64: 1, 32>}, {pipeline_mode = #tpu.pipeline_mode<synchronous>, transform_indices = @transform_10, window_bounds = array<i64: 32, 3>}, {pipeline_mode = #tpu.pipeline_mode<synchronous>, transform_indices = @transform_11, window_bounds = array<i64: 1, 3>}, {transform_indices = @transform_12, window_bounds = array<i64: 1, 1, 3>}]} {
    %c0 = arith.constant 0 : index
    %c0_0 = arith.constant 0 : index
    %c0_1 = arith.constant 0 : index
    %0 = vector.load %arg1[%c0, %c0_0, %c0_1] : memref<1x16x16xf32, #tpu.memory_space<vmem>>, vector<1x16x16xf32>
    %1 = vector.shape_cast %0 : vector<1x16x16xf32> to vector<16x16xf32>
    %c0_2 = arith.constant 0 : index
    %c0_3 = arith.constant 0 : index
    %c0_4 = arith.constant 0 : index
    %2 = vector.load %arg2[%c0_2, %c0_3, %c0_4] : memref<1x16x8xf32, #tpu.memory_space<vmem>>, vector<1x16x8xf32>
    %3 = vector.shape_cast %2 : vector<1x16x8xf32> to vector<16x8xf32>
    %c0_5 = arith.constant 0 : index
    %c0_6 = arith.constant 0 : index
    %c0_7 = arith.constant 0 : index
    %4 = vector.load %arg3[%c0_5, %c0_6, %c0_7] : memref<1x16x1xf32, #tpu.memory_space<vmem>>, vector<1x16x1xf32>
    %5 = vector.shape_cast %4 : vector<1x16x1xf32> to vector<16x1xf32>
    %c0_8 = arith.constant 0 : index
    %c0_9 = arith.constant 0 : index
    %6 = vector.load %arg4[%c0_8, %c0_9] : memref<8x32xf32, #tpu.memory_space<vmem>>, vector<8x32xf32>
    %c0_10 = arith.constant 0 : index
    %c0_11 = arith.constant 0 : index
    %7 = vector.load %arg5[%c0_10, %c0_11] : memref<1x32xf32, #tpu.memory_space<vmem>>, vector<1x32xf32>
    %cst = arith.constant dense<0.000000e+00> : vector<16x8xf32>
    %8 = tpu.matmul %1, %3, %cst {dimension_numbers = #tpu.dot_dimension_numbers<[1], [0], [0], [1], [0, 0, 1, 1], [], []>} : vector<16x16xf32>, vector<16x8xf32>, vector<16x8xf32> -> vector<16x8xf32>
    %cst_12 = arith.constant dense<0.000000e+00> : vector<16x32xf32>
    %9 = tpu.matmul %8, %6, %cst_12 {dimension_numbers = #tpu.dot_dimension_numbers<[1], [0], [0], [1], [0, 0, 1, 1], [], []>} : vector<16x8xf32>, vector<8x32xf32>, vector<16x32xf32> -> vector<16x32xf32>
    %10 = vector.broadcast %7 : vector<1x32xf32> to vector<16x32xf32>
    %11 = arith.addf %9, %10 : vector<16x32xf32>
    %cst_13 = arith.constant 0.000000e+00 : f32
    %12 = vector.broadcast %cst_13 : f32 to vector<16x32xf32>
    %13 = arith.maximumf %11, %12 : vector<16x32xf32>
    %14 = vector.broadcast %5 : vector<16x1xf32> to vector<16x32xf32>
    %15 = arith.mulf %13, %14 : vector<16x32xf32>
    %c0_14 = arith.constant 0 : index
    %c0_15 = arith.constant 0 : index
    %c0_16 = arith.constant 0 : index
    %16 = vector.load %arg6[%c0_14, %c0_15, %c0_16] : memref<2x32x32xf32, #tpu.memory_space<vmem>>, vector<1x32x32xf32>
    %17 = vector.shape_cast %16 : vector<1x32x32xf32> to vector<32x32xf32>
    %c0_17 = arith.constant 0 : index
    %c0_18 = arith.constant 0 : index
    %c0_19 = arith.constant 0 : index
    %18 = vector.load %arg7[%c0_17, %c0_18, %c0_19] : memref<2x1x32xf32, #tpu.memory_space<vmem>>, vector<1x1x32xf32>
    %19 = vector.shape_cast %18 : vector<1x1x32xf32> to vector<1x32xf32>
    %cst_20 = arith.constant dense<0.000000e+00> : vector<16x32xf32>
    %20 = tpu.matmul %1, %15, %cst_20 {dimension_numbers = #tpu.dot_dimension_numbers<[1], [0], [0], [1], [0, 0, 1, 1], [], []>} : vector<16x16xf32>, vector<16x32xf32>, vector<16x32xf32> -> vector<16x32xf32>
    %cst_21 = arith.constant dense<0.000000e+00> : vector<16x32xf32>
    %21 = tpu.matmul %20, %17, %cst_21 {dimension_numbers = #tpu.dot_dimension_numbers<[1], [0], [0], [1], [0, 0, 1, 1], [], []>} : vector<16x32xf32>, vector<32x32xf32>, vector<16x32xf32> -> vector<16x32xf32>
    %22 = vector.broadcast %19 : vector<1x32xf32> to vector<16x32xf32>
    %23 = arith.addf %21, %22 : vector<16x32xf32>
    %cst_22 = arith.constant 0.000000e+00 : f32
    %24 = vector.broadcast %cst_22 : f32 to vector<16x32xf32>
    %25 = arith.maximumf %23, %24 : vector<16x32xf32>
    %26 = vector.broadcast %5 : vector<16x1xf32> to vector<16x32xf32>
    %27 = arith.mulf %25, %26 : vector<16x32xf32>
    %c0_23 = arith.constant 0 : index
    %c0_24 = arith.constant 0 : index
    %c0_25 = arith.constant 0 : index
    %28 = vector.load %arg8[%c0_23, %c0_24, %c0_25] : memref<2x32x1xf32, #tpu.memory_space<vmem>>, vector<1x32x1xf32>
    %29 = vector.shape_cast %28 : vector<1x32x1xf32> to vector<32x1xf32>
    %cst_26 = arith.constant dense<0.000000e+00> : vector<16x1xf32>
    %30 = tpu.matmul %27, %29, %cst_26 {dimension_numbers = #tpu.dot_dimension_numbers<[1], [0], [0], [1], [0, 0, 1, 1], [], []>} : vector<16x32xf32>, vector<32x1xf32>, vector<16x1xf32> -> vector<16x1xf32>
    %cst_27 = arith.constant 0.000000e+00 : f32
    %31 = vector.broadcast %cst_27 : f32 to vector<16x1xf32>
    %32 = arith.cmpf ogt, %5, %31 : vector<16x1xf32>
    %cst_28 = arith.constant -1.000000e+09 : f32
    %33 = vector.broadcast %cst_28 : f32 to vector<16x1xf32>
    %34 = arith.select %32, %30, %33 : vector<16x1xi1>, vector<16x1xf32>
    %35 = tpu.iota {dimensions = array<i32: 0>} : vector<16x16xi32>
    %36 = tpu.iota {dimensions = array<i32: 1>} : vector<16x16xi32>
    %37 = vector.shape_cast %34 : vector<16x1xf32> to vector<16x1xf32>
    %38 = vector.broadcast %37 : vector<16x1xf32> to vector<16x16xf32>
    %39 = arith.cmpi eq, %35, %36 : vector<16x16xi32>
    %cst_29 = arith.constant 0.000000e+00 : f32
    %40 = vector.broadcast %cst_29 : f32 to vector<16x16xf32>
    %41 = arith.select %39, %38, %40 : vector<16x16xi1>, vector<16x16xf32>
    %cst_30 = arith.constant 1.000000e+00 : f32
    %42 = vector.broadcast %cst_30 : f32 to vector<16x16xf32>
    %cst_31 = arith.constant dense<0.000000e+00> : vector<16x16xf32>
    %43 = tpu.matmul %42, %41, %cst_31 {dimension_numbers = #tpu.dot_dimension_numbers<[1], [0], [0], [1], [0, 0, 1, 1], [], []>} : vector<16x16xf32>, vector<16x16xf32>, vector<16x16xf32> -> vector<16x16xf32>
    %44 = arith.cmpi ne, %35, %36 : vector<16x16xi32>
    %45 = arith.cmpf ogt, %38, %43 : vector<16x16xf32>
    %46 = arith.cmpf oeq, %38, %43 : vector<16x16xf32>
    %47 = arith.cmpi slt, %35, %36 : vector<16x16xi32>
    %48 = arith.andi %46, %47 : vector<16x16xi1>
    %49 = arith.ori %45, %48 : vector<16x16xi1>
    %50 = arith.andi %44, %49 : vector<16x16xi1>
    %cst_32 = arith.constant 1.000000e+00 : f32
    %cst_33 = arith.constant 0.000000e+00 : f32
    %51 = vector.broadcast %cst_32 : f32 to vector<16x16xf32>
    %52 = vector.broadcast %cst_33 : f32 to vector<16x16xf32>
    %53 = arith.select %50, %51, %52 : vector<16x16xi1>, vector<16x16xf32>
    %cst_34 = arith.constant dense<0.000000e+00> : vector<16xf32>
    %54 = vector.multi_reduction <add>, %53, %cst_34 [0] : vector<16x16xf32> to vector<16xf32>
    %55 = vector.shape_cast %54 : vector<16xf32> to vector<1x16xf32>
    %56 = tpu.iota {dimensions = array<i32: 0>} : vector<8x16xi32>
    %57 = arith.sitofp %56 : vector<8x16xi32> to vector<8x16xf32>
    %58 = vector.broadcast %55 : vector<1x16xf32> to vector<8x16xf32>
    %59 = arith.cmpf oeq, %58, %57 : vector<8x16xf32>
    %cst_35 = arith.constant 1.000000e+00 : f32
    %cst_36 = arith.constant 0.000000e+00 : f32
    %60 = vector.broadcast %cst_35 : f32 to vector<8x16xf32>
    %61 = vector.broadcast %cst_36 : f32 to vector<8x16xf32>
    %62 = arith.select %59, %60, %61 : vector<8x16xi1>, vector<8x16xf32>
    %cst_37 = arith.constant dense<0.000000e+00> : vector<8x1xf32>
    %63 = tpu.matmul %62, %34, %cst_37 {dimension_numbers = #tpu.dot_dimension_numbers<[1], [0], [0], [1], [0, 0, 1, 1], [], []>} : vector<8x16xf32>, vector<16x1xf32>, vector<8x1xf32> -> vector<8x1xf32>
    %cst_38 = arith.constant 0.000000e+00 : f32
    %64 = vector.broadcast %cst_38 : f32 to vector<8x1xf32>
    %65 = arith.subf %64, %63 : vector<8x1xf32>
    %66 = math.exp %65 : vector<8x1xf32>
    %cst_39 = arith.constant 1.000000e+00 : f32
    %67 = vector.broadcast %cst_39 : f32 to vector<8x1xf32>
    %68 = arith.addf %67, %66 : vector<8x1xf32>
    %cst_40 = arith.constant 1.000000e+00 : f32
    %69 = vector.broadcast %cst_40 : f32 to vector<8x1xf32>
    %70 = arith.divf %69, %68 : vector<8x1xf32>
    %cst_41 = arith.constant dense<0.000000e+00> : vector<8x32xf32>
    %71 = tpu.matmul %62, %27, %cst_41 {dimension_numbers = #tpu.dot_dimension_numbers<[1], [0], [0], [1], [0, 0, 1, 1], [], []>} : vector<8x16xf32>, vector<16x32xf32>, vector<8x32xf32> -> vector<8x32xf32>
    %72 = vector.broadcast %70 : vector<8x1xf32> to vector<8x32xf32>
    %73 = arith.mulf %71, %72 : vector<8x32xf32>
    %cst_42 = arith.constant dense<0.000000e+00> : vector<8x16xf32>
    %74 = tpu.matmul %62, %1, %cst_42 {dimension_numbers = #tpu.dot_dimension_numbers<[1], [0], [0], [1], [0, 0, 1, 1], [], []>} : vector<8x16xf32>, vector<16x16xf32>, vector<8x16xf32> -> vector<8x16xf32>
    %cst_43 = arith.constant dense<0.000000e+00> : vector<8x8xf32>
    %75 = tpu.matmul %74, %62, %cst_43 {dimension_numbers = #tpu.dot_dimension_numbers<[1], [1], [0], [0], [0, 0, 1, 0], [], []>} : vector<8x16xf32>, vector<8x16xf32>, vector<8x8xf32> -> vector<8x8xf32>
    %cst_44 = arith.constant dense<0.000000e+00> : vector<8x1xf32>
    %76 = tpu.matmul %62, %5, %cst_44 {dimension_numbers = #tpu.dot_dimension_numbers<[1], [0], [0], [1], [0, 0, 1, 1], [], []>} : vector<8x16xf32>, vector<16x1xf32>, vector<8x1xf32> -> vector<8x1xf32>
    %c1 = arith.constant 1 : index
    %c0_45 = arith.constant 0 : index
    %c0_46 = arith.constant 0 : index
    %77 = vector.load %arg6[%c1, %c0_45, %c0_46] : memref<2x32x32xf32, #tpu.memory_space<vmem>>, vector<1x32x32xf32>
    %78 = vector.shape_cast %77 : vector<1x32x32xf32> to vector<32x32xf32>
    %c1_47 = arith.constant 1 : index
    %c0_48 = arith.constant 0 : index
    %c0_49 = arith.constant 0 : index
    %79 = vector.load %arg7[%c1_47, %c0_48, %c0_49] : memref<2x1x32xf32, #tpu.memory_space<vmem>>, vector<1x1x32xf32>
    %80 = vector.shape_cast %79 : vector<1x1x32xf32> to vector<1x32xf32>
    %cst_50 = arith.constant dense<0.000000e+00> : vector<8x32xf32>
    %81 = tpu.matmul %75, %73, %cst_50 {dimension_numbers = #tpu.dot_dimension_numbers<[1], [0], [0], [1], [0, 0, 1, 1], [], []>} : vector<8x8xf32>, vector<8x32xf32>, vector<8x32xf32> -> vector<8x32xf32>
    %cst_51 = arith.constant dense<0.000000e+00> : vector<8x32xf32>
    %82 = tpu.matmul %81, %78, %cst_51 {dimension_numbers = #tpu.dot_dimension_numbers<[1], [0], [0], [1], [0, 0, 1, 1], [], []>} : vector<8x32xf32>, vector<32x32xf32>, vector<8x32xf32> -> vector<8x32xf32>
    %83 = vector.broadcast %80 : vector<1x32xf32> to vector<8x32xf32>
    %84 = arith.addf %82, %83 : vector<8x32xf32>
    %cst_52 = arith.constant 0.000000e+00 : f32
    %85 = vector.broadcast %cst_52 : f32 to vector<8x32xf32>
    %86 = arith.maximumf %84, %85 : vector<8x32xf32>
    %87 = vector.broadcast %76 : vector<8x1xf32> to vector<8x32xf32>
    %88 = arith.mulf %86, %87 : vector<8x32xf32>
    %c1_53 = arith.constant 1 : index
    %c0_54 = arith.constant 0 : index
    %c0_55 = arith.constant 0 : index
    %89 = vector.load %arg8[%c1_53, %c0_54, %c0_55] : memref<2x32x1xf32, #tpu.memory_space<vmem>>, vector<1x32x1xf32>
    %90 = vector.shape_cast %89 : vector<1x32x1xf32> to vector<32x1xf32>
    %cst_56 = arith.constant dense<0.000000e+00> : vector<8x1xf32>
    %91 = tpu.matmul %88, %90, %cst_56 {dimension_numbers = #tpu.dot_dimension_numbers<[1], [0], [0], [1], [0, 0, 1, 1], [], []>} : vector<8x32xf32>, vector<32x1xf32>, vector<8x1xf32> -> vector<8x1xf32>
    %cst_57 = arith.constant 0.000000e+00 : f32
    %92 = vector.broadcast %cst_57 : f32 to vector<8x1xf32>
    %93 = arith.cmpf ogt, %76, %92 : vector<8x1xf32>
    %cst_58 = arith.constant -1.000000e+09 : f32
    %94 = vector.broadcast %cst_58 : f32 to vector<8x1xf32>
    %95 = arith.select %93, %91, %94 : vector<8x1xi1>, vector<8x1xf32>
    %96 = tpu.iota {dimensions = array<i32: 0>} : vector<8x8xi32>
    %97 = tpu.iota {dimensions = array<i32: 1>} : vector<8x8xi32>
    %98 = vector.shape_cast %95 : vector<8x1xf32> to vector<8x1xf32>
    %99 = vector.broadcast %98 : vector<8x1xf32> to vector<8x8xf32>
    %100 = arith.cmpi eq, %96, %97 : vector<8x8xi32>
    %cst_59 = arith.constant 0.000000e+00 : f32
    %101 = vector.broadcast %cst_59 : f32 to vector<8x8xf32>
    %102 = arith.select %100, %99, %101 : vector<8x8xi1>, vector<8x8xf32>
    %cst_60 = arith.constant 1.000000e+00 : f32
    %103 = vector.broadcast %cst_60 : f32 to vector<8x8xf32>
    %cst_61 = arith.constant dense<0.000000e+00> : vector<8x8xf32>
    %104 = tpu.matmul %103, %102, %cst_61 {dimension_numbers = #tpu.dot_dimension_numbers<[1], [0], [0], [1], [0, 0, 1, 1], [], []>} : vector<8x8xf32>, vector<8x8xf32>, vector<8x8xf32> -> vector<8x8xf32>
    %105 = arith.cmpi ne, %96, %97 : vector<8x8xi32>
    %106 = arith.cmpf ogt, %99, %104 : vector<8x8xf32>
    %107 = arith.cmpf oeq, %99, %104 : vector<8x8xf32>
    %108 = arith.cmpi slt, %96, %97 : vector<8x8xi32>
    %109 = arith.andi %107, %108 : vector<8x8xi1>
    %110 = arith.ori %106, %109 : vector<8x8xi1>
    %111 = arith.andi %105, %110 : vector<8x8xi1>
    %cst_62 = arith.constant 1.000000e+00 : f32
    %cst_63 = arith.constant 0.000000e+00 : f32
    %112 = vector.broadcast %cst_62 : f32 to vector<8x8xf32>
    %113 = vector.broadcast %cst_63 : f32 to vector<8x8xf32>
    %114 = arith.select %111, %112, %113 : vector<8x8xi1>, vector<8x8xf32>
    %cst_64 = arith.constant dense<0.000000e+00> : vector<8xf32>
    %115 = vector.multi_reduction <add>, %114, %cst_64 [0] : vector<8x8xf32> to vector<8xf32>
    %116 = vector.shape_cast %115 : vector<8xf32> to vector<1x8xf32>
    %117 = tpu.iota {dimensions = array<i32: 0>} : vector<4x8xi32>
    %118 = arith.sitofp %117 : vector<4x8xi32> to vector<4x8xf32>
    %119 = vector.broadcast %116 : vector<1x8xf32> to vector<4x8xf32>
    %120 = arith.cmpf oeq, %119, %118 : vector<4x8xf32>
    %cst_65 = arith.constant 1.000000e+00 : f32
    %cst_66 = arith.constant 0.000000e+00 : f32
    %121 = vector.broadcast %cst_65 : f32 to vector<4x8xf32>
    %122 = vector.broadcast %cst_66 : f32 to vector<4x8xf32>
    %123 = arith.select %120, %121, %122 : vector<4x8xi1>, vector<4x8xf32>
    %cst_67 = arith.constant dense<0.000000e+00> : vector<4x1xf32>
    %124 = tpu.matmul %123, %95, %cst_67 {dimension_numbers = #tpu.dot_dimension_numbers<[1], [0], [0], [1], [0, 0, 1, 1], [], []>} : vector<4x8xf32>, vector<8x1xf32>, vector<4x1xf32> -> vector<4x1xf32>
    %cst_68 = arith.constant 0.000000e+00 : f32
    %125 = vector.broadcast %cst_68 : f32 to vector<4x1xf32>
    %126 = arith.subf %125, %124 : vector<4x1xf32>
    %127 = math.exp %126 : vector<4x1xf32>
    %cst_69 = arith.constant 1.000000e+00 : f32
    %128 = vector.broadcast %cst_69 : f32 to vector<4x1xf32>
    %129 = arith.addf %128, %127 : vector<4x1xf32>
    %cst_70 = arith.constant 1.000000e+00 : f32
    %130 = vector.broadcast %cst_70 : f32 to vector<4x1xf32>
    %131 = arith.divf %130, %129 : vector<4x1xf32>
    %cst_71 = arith.constant dense<0.000000e+00> : vector<4x32xf32>
    %132 = tpu.matmul %123, %88, %cst_71 {dimension_numbers = #tpu.dot_dimension_numbers<[1], [0], [0], [1], [0, 0, 1, 1], [], []>} : vector<4x8xf32>, vector<8x32xf32>, vector<4x32xf32> -> vector<4x32xf32>
    %133 = vector.broadcast %131 : vector<4x1xf32> to vector<4x32xf32>
    %134 = arith.mulf %132, %133 : vector<4x32xf32>
    %cst_72 = arith.constant dense<0.000000e+00> : vector<32xf32>
    %135 = vector.multi_reduction <add>, %134, %cst_72 [0] : vector<4x32xf32> to vector<32xf32>
    %136 = vector.shape_cast %135 : vector<32xf32> to vector<1x32xf32>
    %cst_73 = arith.constant 4.000000e+00 : f32
    %137 = vector.broadcast %cst_73 : f32 to vector<1x32xf32>
    %138 = arith.divf %136, %137 : vector<1x32xf32>
    %c0_74 = arith.constant 0 : index
    %c0_75 = arith.constant 0 : index
    %139 = vector.load %arg9[%c0_74, %c0_75] : memref<32x32xf32, #tpu.memory_space<vmem>>, vector<32x32xf32>
    %cst_76 = arith.constant dense<0.000000e+00> : vector<1x32xf32>
    %140 = tpu.matmul %138, %139, %cst_76 {dimension_numbers = #tpu.dot_dimension_numbers<[1], [0], [0], [1], [0, 0, 1, 1], [], []>} : vector<1x32xf32>, vector<32x32xf32>, vector<1x32xf32> -> vector<1x32xf32>
    %c0_77 = arith.constant 0 : index
    %c0_78 = arith.constant 0 : index
    %141 = vector.load %arg10[%c0_77, %c0_78] : memref<1x32xf32, #tpu.memory_space<vmem>>, vector<1x32xf32>
    %142 = arith.addf %140, %141 : vector<1x32xf32>
    %cst_79 = arith.constant 0.000000e+00 : f32
    %143 = vector.broadcast %cst_79 : f32 to vector<1x32xf32>
    %144 = arith.maximumf %142, %143 : vector<1x32xf32>
    %c0_80 = arith.constant 0 : index
    %c0_81 = arith.constant 0 : index
    %145 = vector.load %arg11[%c0_80, %c0_81] : memref<32x3xf32, #tpu.memory_space<vmem>>, vector<32x3xf32>
    %cst_82 = arith.constant dense<0.000000e+00> : vector<1x3xf32>
    %146 = tpu.matmul %144, %145, %cst_82 {dimension_numbers = #tpu.dot_dimension_numbers<[1], [0], [0], [1], [0, 0, 1, 1], [], []>} : vector<1x32xf32>, vector<32x3xf32>, vector<1x3xf32> -> vector<1x3xf32>
    %c0_83 = arith.constant 0 : index
    %c0_84 = arith.constant 0 : index
    %147 = vector.load %arg12[%c0_83, %c0_84] : memref<1x3xf32, #tpu.memory_space<vmem>>, vector<1x3xf32>
    %148 = arith.addf %146, %147 : vector<1x3xf32>
    %cst_85 = arith.constant dense<0xFF800000> : vector<1xf32>
    %149 = vector.multi_reduction <maximumf>, %148, %cst_85 [1] : vector<1x3xf32> to vector<1xf32>
    %150 = vector.shape_cast %149 : vector<1xf32> to vector<1x1xf32>
    %151 = vector.broadcast %150 : vector<1x1xf32> to vector<1x3xf32>
    %152 = arith.subf %148, %151 : vector<1x3xf32>
    %153 = math.exp %152 : vector<1x3xf32>
    %154 = vector.broadcast %150 : vector<1x1xf32> to vector<1x3xf32>
    %155 = arith.subf %148, %154 : vector<1x3xf32>
    %cst_86 = arith.constant dense<0.000000e+00> : vector<1xf32>
    %156 = vector.multi_reduction <add>, %153, %cst_86 [1] : vector<1x3xf32> to vector<1xf32>
    %157 = vector.shape_cast %156 : vector<1xf32> to vector<1x1xf32>
    %158 = math.log %157 : vector<1x1xf32>
    %159 = vector.broadcast %158 : vector<1x1xf32> to vector<1x3xf32>
    %160 = arith.subf %155, %159 : vector<1x3xf32>
    %c0_87 = arith.constant 0 : index
    %c0_88 = arith.constant 0 : index
    %c0_89 = arith.constant 0 : index
    %161 = vector.load %arg13[%c0_87, %c0_88, %c0_89] : memref<1x1x3xf32, #tpu.memory_space<vmem>>, vector<1x1x3xf32>
    %162 = vector.shape_cast %161 : vector<1x1x3xf32> to vector<1x3xf32>
    %163 = vector.shape_cast %160 : vector<1x3xf32> to vector<1x1x3xf32>
    tpu.vector_store %arg13[%c0_87, %c0_88, %c0_89], %163 {strides = array<i32>} : memref<1x1x3xf32, #tpu.memory_space<vmem>>, vector<1x1x3xf32>,
    return
  }
  func.func @transform_0(%arg0: i32) -> (i32, i32, i32) {
    %c0_i32 = arith.constant 0 : i32
    %c0_i32_0 = arith.constant 0 : i32
    %c0_i32_1 = arith.constant 0 : i32
    return %arg0, %c0_i32, %c0_i32_0 : i32, i32, i32
  }
  func.func @transform_1(%arg0: i32) -> (i32, i32, i32) {
    %c0_i32 = arith.constant 0 : i32
    %c0_i32_0 = arith.constant 0 : i32
    %c0_i32_1 = arith.constant 0 : i32
    return %arg0, %c0_i32, %c0_i32_0 : i32, i32, i32
  }
  func.func @transform_2(%arg0: i32) -> (i32, i32, i32) {
    %c0_i32 = arith.constant 0 : i32
    %c0_i32_0 = arith.constant 0 : i32
    %c0_i32_1 = arith.constant 0 : i32
    return %arg0, %c0_i32, %c0_i32_0 : i32, i32, i32
  }
  func.func @transform_3(%arg0: i32) -> (i32, i32) {
    %c0_i32 = arith.constant 0 : i32
    %c0_i32_0 = arith.constant 0 : i32
    %c0_i32_1 = arith.constant 0 : i32
    return %c0_i32, %c0_i32_0 : i32, i32
  }
  func.func @transform_4(%arg0: i32) -> (i32, i32) {
    %c0_i32 = arith.constant 0 : i32
    %c0_i32_0 = arith.constant 0 : i32
    %c0_i32_1 = arith.constant 0 : i32
    return %c0_i32, %c0_i32_0 : i32, i32
  }
  func.func @transform_5(%arg0: i32) -> (i32, i32, i32) {
    %c0_i32 = arith.constant 0 : i32
    %c0_i32_0 = arith.constant 0 : i32
    %c0_i32_1 = arith.constant 0 : i32
    %c0_i32_2 = arith.constant 0 : i32
    return %c0_i32, %c0_i32_0, %c0_i32_1 : i32, i32, i32
  }
  func.func @transform_6(%arg0: i32) -> (i32, i32, i32) {
    %c0_i32 = arith.constant 0 : i32
    %c0_i32_0 = arith.constant 0 : i32
    %c0_i32_1 = arith.constant 0 : i32
    %c0_i32_2 = arith.constant 0 : i32
    return %c0_i32, %c0_i32_0, %c0_i32_1 : i32, i32, i32
  }
  func.func @transform_7(%arg0: i32) -> (i32, i32, i32) {
    %c0_i32 = arith.constant 0 : i32
    %c0_i32_0 = arith.constant 0 : i32
    %c0_i32_1 = arith.constant 0 : i32
    %c0_i32_2 = arith.constant 0 : i32
    return %c0_i32, %c0_i32_0, %c0_i32_1 : i32, i32, i32
  }
  func.func @transform_8(%arg0: i32) -> (i32, i32) {
    %c0_i32 = arith.constant 0 : i32
    %c0_i32_0 = arith.constant 0 : i32
    %c0_i32_1 = arith.constant 0 : i32
    return %c0_i32, %c0_i32_0 : i32, i32
  }
  func.func @transform_9(%arg0: i32) -> (i32, i32) {
    %c0_i32 = arith.constant 0 : i32
    %c0_i32_0 = arith.constant 0 : i32
    %c0_i32_1 = arith.constant 0 : i32
    return %c0_i32, %c0_i32_0 : i32, i32
  }
  func.func @transform_10(%arg0: i32) -> (i32, i32) {
    %c0_i32 = arith.constant 0 : i32
    %c0_i32_0 = arith.constant 0 : i32
    %c0_i32_1 = arith.constant 0 : i32
    return %c0_i32, %c0_i32_0 : i32, i32
  }
  func.func @transform_11(%arg0: i32) -> (i32, i32) {
    %c0_i32 = arith.constant 0 : i32
    %c0_i32_0 = arith.constant 0 : i32
    %c0_i32_1 = arith.constant 0 : i32
    return %c0_i32, %c0_i32_0 : i32, i32
  }
  func.func @transform_12(%arg0: i32) -> (i32, i32, i32) {
    %c0_i32 = arith.constant 0 : i32
    %c0_i32_0 = arith.constant 0 : i32
    %c0_i32_1 = arith.constant 0 : i32
    return %arg0, %c0_i32, %c0_i32_0 : i32, i32, i32
  }
}

</mosaic_0001>

<llo_original>
// kernel: net_forward.1
$region0: #{net_forward.1}
  #allocation0 [shape = 'u32[]', space=smem, size = 0x4, offset = 0x4, fixed_abs, tag = 'smem constant byte address 0x4 - core index']
  #allocation1 [shape = 'u32[72,128]{1,0:T(1,128)}', space=vmem, size = 0x9000, scoped, tag = 'internal scratch']
  %s0 = inlined_call_operand.vmem [shape: f32[2,16,16], index: 0, kind: input, shape index: {}]
  %s1 = inlined_call_operand.vmem [shape: f32[2,16,8], index: 1, kind: input, shape index: {}]
  %s2 = inlined_call_operand.vmem [shape: f32[2,16,1], index: 2, kind: input, shape index: {}]
  %s3 = inlined_call_operand.vmem [shape: f32[8,32], index: 3, kind: input, shape index: {}]
  %s4 = inlined_call_operand.vmem [shape: f32[1,32], index: 4, kind: input, shape index: {}]
  %s5 = inlined_call_operand.vmem [shape: f32[2,32,32], index: 5, kind: input, shape index: {}]
  %s6 = inlined_call_operand.vmem [shape: f32[2,1,32], index: 6, kind: input, shape index: {}]
  %s7 = inlined_call_operand.vmem [shape: f32[2,32,1], index: 7, kind: input, shape index: {}]
  %s8 = inlined_call_operand.vmem [shape: f32[32,32], index: 8, kind: input, shape index: {}]
  %s9 = inlined_call_operand.vmem [shape: f32[1,32], index: 9, kind: input, shape index: {}]
  %s10 = inlined_call_operand.vmem [shape: f32[32,3], index: 10, kind: input, shape index: {}]
  %s11 = inlined_call_operand.vmem [shape: f32[1,3], index: 11, kind: input, shape index: {}]
  %s12 = inlined_call_operand.hbm [shape: f32[2,1,3], index: 12, kind: output, shape index: {}]
  %s13 = sld [smem:[#allocation0]]
  $region81: #{net_forward.1} parent=0
    _
  %s15 = ssub.s32 1, %s13
  %s16 = scalar_select 0, %s15, %s13
  $region1: #{net_forward.1} parent=0
    #allocation2 [shape = 'u8[1024]{0}', space=vmem, size = 0x400, scoped, tag = 'output window, operand 0']
    #allocation3 [shape = 's32[2]{0}', space=sflag, size = 0x8, scoped, tag = 'scoped memory for net_forward.1']
    %17 = vsyncpa [#allocation3], 0
    %s18 = scalar_lea.sflag [#allocation3], 1
    %19 = vsyncpa %s18, 0
    loop: start=0, step=1, limit=4
    $region2: #{net_forward.1} parent=1 // loop_pre_header
      _
    $region3: #{net_forward.1} parent=1 // loop_header
      %s21 = sphi 0, %s25
      %p22 = scmp.ge.s32.totalorder %s21, 4
      %s31 = sphi 0, %s33
      %s34 = sphi 0, %s31
      %s35 = sphi 0, %s34
      %s51 = sphi 0, %s35
      %s57 = sphi 0, %s59
      %s60 = sphi 0, %s57
      %s61 = sphi 0, %s60
      %s77 = sphi 0, %s61
      %s83 = sphi 0, %s85
      %s86 = sphi 0, %s83
      %s87 = sphi 0, %s86
      %s103 = sphi 0, %s87
      %s107 = sphi 0, %s107
      %s109 = sphi 0, %s107
      %s110 = sphi 0, %s109
      %s124 = sphi 0, %s110
      %s128 = sphi 0, %s128
      %s130 = sphi 0, %s128
      %s131 = sphi 0, %s130
      %s145 = sphi 0, %s131
      %s149 = sphi 0, %s149
      %s151 = sphi 0, %s149
      %s152 = sphi 0, %s151
      %s166 = sphi 0, %s152
      %s170 = sphi 0, %s170
      %s172 = sphi 0, %s170
      %s173 = sphi 0, %s172
      %s187 = sphi 0, %s173
      %s191 = sphi 0, %s191
      %s193 = sphi 0, %s191
      %s194 = sphi 0, %s193
      %s208 = sphi 0, %s194
      %s212 = sphi 0, %s212
      %s214 = sphi 0, %s212
      %s215 = sphi 0, %s214
      %s229 = sphi 0, %s215
      %s233 = sphi 0, %s233
      %s235 = sphi 0, %s233
      %s236 = sphi 0, %s235
      %s250 = sphi 0, %s236
      %s254 = sphi 0, %s254
      %s256 = sphi 0, %s254
      %s257 = sphi 0, %s256
      %s271 = sphi 0, %s257
      %s275 = sphi 0, %s275
      %s277 = sphi 0, %s275
      %s278 = sphi 0, %s277
      %s292 = sphi 0, %s278
      %s298 = sphi 0, %s300
      %s301 = sphi 0, %s298
      %s302 = sphi 0, %s301
      %s318 = sphi 0, %s302
    $region4: #{net_forward.1} parent=1 // loop_header_branch
      %24 = sbr.rel (%p22) target = $region8
    $region5: #{net_forward.1} parent=1 // loop_body
      %s26 = ssub.s32 %s21, 1
      %s27 = ssub.s32 %s21, 2
      %s28 = sadd.s32 %s21, 1
      %s29 = ssub.s32 %s21, %s28
      %p30 = scmp.eq.s32.totalorder %s29, 0
      %s32 = sadd.s32 %s31, 1
      %s33 = scalar_select %p30, %s31, %s32
      %p36 = pneg %p30
      %p37 = scmp.eq.s32.totalorder %s21, 1
      %p38 = por %p36, %p37
      %p39 = scmp.ne.s32.totalorder %s31, %s34
      %p40 = scmp.eq.s32.totalorder %s21, 0
      %p41 = por %p39, %p40
      %p42 = scmp.ne.s32.totalorder %s31, %s34
      %p43 = scmp.eq.s32.totalorder %s26, 1
      %p44 = por %p42, %p43
      %p45 = scmp.ne.s32.totalorder %s34, %s35
      %p46 = scmp.eq.s32.totalorder %s26, 0
      %p47 = por %p45, %p46
      %p48 = scmp.ne.s32.totalorder %s34, %s35
      %p49 = scmp.eq.s32.totalorder %s27, 1
      %p50 = por %p48, %p49
      %p52 = scmp.ne.s32.totalorder %s35, %s51
      %p53 = scmp.eq.s32.totalorder %s27, 0
      %p54 = por %p52, %p53
      %s55 = ssub.s32 %s21, %s28
      %p56 = scmp.eq.s32.totalorder %s55, 0
      %s58 = sadd.s32 %s57, 1
      %s59 = scalar_select %p56, %s57, %s58
      %p62 = pneg %p56
      %p63 = scmp.eq.s32.totalorder %s21, 1
      %p64 = por %p62, %p63
      %p65 = scmp.ne.s32.totalorder %s57, %s60
      %p66 = scmp.eq.s32.totalorder %s21, 0
      %p67 = por %p65, %p66
      %p68 = scmp.ne.s32.totalorder %s57, %s60
      %p69 = scmp.eq.s32.totalorder %s26, 1
      %p70 = por %p68, %p69
      %p71 = scmp.ne.s32.totalorder %s60, %s61
      %p72 = scmp.eq.s32.totalorder %s26, 0
      %p73 = por %p71, %p72
      %p74 = scmp.ne.s32.totalorder %s60, %s61
      %p75 = scmp.eq.s32.totalorder %s27, 1
      %p76 = por %p74, %p75
      %p78 = scmp.ne.s32.totalorder %s61, %s77
      %p79 = scmp.eq.s32.totalorder %s27, 0
      %p80 = por %p78, %p79
      %s81 = ssub.s32 %s21, %s28
      %p82 = scmp.eq.s32.totalorder %s81, 0
      %s84 = sadd.s32 %s83, 1
      %s85 = scalar_select %p82, %s83, %s84
      %p88 = pneg %p82
      %p89 = scmp.eq.s32.totalorder %s21, 1
      %p90 = por %p88, %p89
      %p91 = scmp.ne.s32.totalorder %s83, %s86
      %p92 = scmp.eq.s32.totalorder %s21, 0
      %p93 = por %p91, %p92
      %p94 = scmp.ne.s32.totalorder %s83, %s86
      %p95 = scmp.eq.s32.totalorder %s26, 1
      %p96 = por %p94, %p95
      %p97 = scmp.ne.s32.totalorder %s86, %s87
      %p98 = scmp.eq.s32.totalorder %s26, 0
      %p99 = por %p97, %p98
      %p100 = scmp.ne.s32.totalorder %s86, %s87
      %p101 = scmp.eq.s32.totalorder %s27, 1
      %p102 = por %p100, %p101
      %p104 = scmp.ne.s32.totalorder %s87, %s103
      %p105 = scmp.eq.s32.totalorder %s27, 0
      %p106 = por %p104, %p105
      %s108 = sadd.s32 %s107, 1
      %p111 = scmp.eq.s32.totalorder %s21, 1
      %p112 = scmp.ne.s32.totalorder %s107, %s109
      %p113 = scmp.eq.s32.totalorder %s21, 0
      %p114 = por %p112, %p113
      %p115 = scmp.ne.s32.totalorder %s107, %s109
      %p116 = scmp.eq.s32.totalorder %s26, 1
      %p117 = por %p115, %p116
      %p118 = scmp.ne.s32.totalorder %s109, %s110
      %p119 = scmp.eq.s32.totalorder %s26, 0
      %p120 = por %p118, %p119
      %p121 = scmp.ne.s32.totalorder %s109, %s110
      %p122 = scmp.eq.s32.totalorder %s27, 1
      %p123 = por %p121, %p122
      %p125 = scmp.ne.s32.totalorder %s110, %s124
      %p126 = scmp.eq.s32.totalorder %s27, 0
      %p127 = por %p125, %p126
      %s129 = sadd.s32 %s128, 1
      %p132 = scmp.eq.s32.totalorder %s21, 1
      %p133 = scmp.ne.s32.totalorder %s128, %s130
      %p134 = scmp.eq.s32.totalorder %s21, 0
      %p135 = por %p133, %p134
      %p136 = scmp.ne.s32.totalorder %s128, %s130
      %p137 = scmp.eq.s32.totalorder %s26, 1
      %p138 = por %p136, %p137
      %p139 = scmp.ne.s32.totalorder %s130, %s131
      %p140 = scmp.eq.s32.totalorder %s26, 0
      %p141 = por %p139, %p140
      %p142 = scmp.ne.s32.totalorder %s130, %s131
      %p143 = scmp.eq.s32.totalorder %s27, 1
      %p144 = por %p142, %p143
      %p146 = scmp.ne.s32.totalorder %s131, %s145
      %p147 = scmp.eq.s32.totalorder %s27, 0
      %p148 = por %p146, %p147
      %s150 = sadd.s32 %s149, 1
      %p153 = scmp.eq.s32.totalorder %s21, 1
      %p154 = scmp.ne.s32.totalorder %s149, %s151
      %p155 = scmp.eq.s32.totalorder %s21, 0
      %p156 = por %p154, %p155
      %p157 = scmp.ne.s32.totalorder %s149, %s151
      %p158 = scmp.eq.s32.totalorder %s26, 1
      %p159 = por %p157, %p158
      %p160 = scmp.ne.s32.totalorder %s151, %s152
      %p161 = scmp.eq.s32.totalorder %s26, 0
      %p162 = por %p160, %p161
      %p163 = scmp.ne.s32.totalorder %s151, %s152
      %p164 = scmp.eq.s32.totalorder %s27, 1
      %p165 = por %p163, %p164
      %p167 = scmp.ne.s32.totalorder %s152, %s166
      %p168 = scmp.eq.s32.totalorder %s27, 0
      %p169 = por %p167, %p168
      %s171 = sadd.s32 %s170, 1
      %p174 = scmp.eq.s32.totalorder %s21, 1
      %p175 = scmp.ne.s32.totalorder %s170, %s172
      %p176 = scmp.eq.s32.totalorder %s21, 0
      %p177 = por %p175, %p176
      %p178 = scmp.ne.s32.totalorder %s170, %s172
      %p179 = scmp.eq.s32.totalorder %s26, 1
      %p180 = por %p178, %p179
      %p181 = scmp.ne.s32.totalorder %s172, %s173
      %p182 = scmp.eq.s32.totalorder %s26, 0
      %p183 = por %p181, %p182
      %p184 = scmp.ne.s32.totalorder %s172, %s173
      %p185 = scmp.eq.s32.totalorder %s27, 1
      %p186 = por %p184, %p185
      %p188 = scmp.ne.s32.totalorder %s173, %s187
      %p189 = scmp.eq.s32.totalorder %s27, 0
      %p190 = por %p188, %p189
      %s192 = sadd.s32 %s191, 1
      %p195 = scmp.eq.s32.totalorder %s21, 1
      %p196 = scmp.ne.s32.totalorder %s191, %s193
      %p197 = scmp.eq.s32.totalorder %s21, 0
      %p198 = por %p196, %p197
      %p199 = scmp.ne.s32.totalorder %s191, %s193
      %p200 = scmp.eq.s32.totalorder %s26, 1
      %p201 = por %p199, %p200
      %p202 = scmp.ne.s32.totalorder %s193, %s194
      %p203 = scmp.eq.s32.totalorder %s26, 0
      %p204 = por %p202, %p203
      %p205 = scmp.ne.s32.totalorder %s193, %s194
      %p206 = scmp.eq.s32.totalorder %s27, 1
      %p207 = por %p205, %p206
      %p209 = scmp.ne.s32.totalorder %s194, %s208
      %p210 = scmp.eq.s32.totalorder %s27, 0
      %p211 = por %p209, %p210
      %s213 = sadd.s32 %s212, 1
      %p216 = scmp.eq.s32.totalorder %s21, 1
      %p217 = scmp.ne.s32.totalorder %s212, %s214
      %p218 = scmp.eq.s32.totalorder %s21, 0
      %p219 = por %p217, %p218
      %p220 = scmp.ne.s32.totalorder %s212, %s214
      %p221 = scmp.eq.s32.totalorder %s26, 1
      %p222 = por %p220, %p221
      %p223 = scmp.ne.s32.totalorder %s214, %s215
      %p224 = scmp.eq.s32.totalorder %s26, 0
      %p225 = por %p223, %p224
      %p226 = scmp.ne.s32.totalorder %s214, %s215
      %p227 = scmp.eq.s32.totalorder %s27, 1
      %p228 = por %p226, %p227
      %p230 = scmp.ne.s32.totalorder %s215, %s229
      %p231 = scmp.eq.s32.totalorder %s27, 0
      %p232 = por %p230, %p231
      %s234 = sadd.s32 %s233, 1
      %p237 = scmp.eq.s32.totalorder %s21, 1
      %p238 = scmp.ne.s32.totalorder %s233, %s235
      %p239 = scmp.eq.s32.totalorder %s21, 0
      %p240 = por %p238, %p239
      %p241 = scmp.ne.s32.totalorder %s233, %s235
      %p242 = scmp.eq.s32.totalorder %s26, 1
      %p243 = por %p241, %p242
      %p244 = scmp.ne.s32.totalorder %s235, %s236
      %p245 = scmp.eq.s32.totalorder %s26, 0
      %p246 = por %p244, %p245
      %p247 = scmp.ne.s32.totalorder %s235, %s236
      %p248 = scmp.eq.s32.totalorder %s27, 1
      %p249 = por %p247, %p248
      %p251 = scmp.ne.s32.totalorder %s236, %s250
      %p252 = scmp.eq.s32.totalorder %s27, 0
      %p253 = por %p251, %p252
      %s255 = sadd.s32 %s254, 1
      %p258 = scmp.eq.s32.totalorder %s21, 1
      %p259 = scmp.ne.s32.totalorder %s254, %s256
      %p260 = scmp.eq.s32.totalorder %s21, 0
      %p261 = por %p259, %p260
      %p262 = scmp.ne.s32.totalorder %s254, %s256
      %p263 = scmp.eq.s32.totalorder %s26, 1
      %p264 = por %p262, %p263
      %p265 = scmp.ne.s32.totalorder %s256, %s257
      %p266 = scmp.eq.s32.totalorder %s26, 0
      %p267 = por %p265, %p266
      %p268 = scmp.ne.s32.totalorder %s256, %s257
      %p269 = scmp.eq.s32.totalorder %s27, 1
      %p270 = por %p268, %p269
      %p272 = scmp.ne.s32.totalorder %s257, %s271
      %p273 = scmp.eq.s32.totalorder %s27, 0
      %p274 = por %p272, %p273
      %s276 = sadd.s32 %s275, 1
      %p279 = scmp.eq.s32.totalorder %s21, 1
      %p280 = scmp.ne.s32.totalorder %s275, %s277
      %p281 = scmp.eq.s32.totalorder %s21, 0
      %p282 = por %p280, %p281
      %p283 = scmp.ne.s32.totalorder %s275, %s277
      %p284 = scmp.eq.s32.totalorder %s26, 1
      %p285 = por %p283, %p284
      %p286 = scmp.ne.s32.totalorder %s277, %s278
      %p287 = scmp.eq.s32.totalorder %s26, 0
      %p288 = por %p286, %p287
      %p289 = scmp.ne.s32.totalorder %s277, %s278
      %p290 = scmp.eq.s32.totalorder %s27, 1
      %p291 = por %p289, %p290
      %p293 = scmp.ne.s32.totalorder %s278, %s292
      %p294 = scmp.eq.s32.totalorder %s27, 0
      %p295 = por %p293, %p294
      %s296 = ssub.s32 %s21, %s28
      %p297 = scmp.eq.s32.totalorder %s296, 0
      %s299 = sadd.s32 %s298, 1
      %s300 = scalar_select %p297, %s298, %s299
      %p303 = pneg %p297
      %p304 = scmp.eq.s32.totalorder %s21, 1
      %p305 = por %p303, %p304
      %p306 = scmp.ne.s32.totalorder %s298, %s301
      %p307 = scmp.eq.s32.totalorder %s21, 0
      %p308 = por %p306, %p307
      %p309 = scmp.ne.s32.totalorder %s298, %s301
      %p310 = scmp.eq.s32.totalorder %s26, 1
      %p311 = por %p309, %p310
      %p312 = scmp.ne.s32.totalorder %s301, %s302
      %p313 = scmp.eq.s32.totalorder %s26, 0
      %p314 = por %p312, %p313
      %p315 = scmp.ne.s32.totalorder %s301, %s302
      %p316 = scmp.eq.s32.totalorder %s27, 1
      %p317 = por %p315, %p316
      %p319 = scmp.ne.s32.totalorder %s302, %s318
      %p320 = scmp.eq.s32.totalorder %s27, 0
      %p321 = por %p319, %p320
      %p322 = scmp.le.s32.totalorder 1, %s21
      %p323 = scmp.lt.s32.totalorder %s21, 3
      %p324 = pnand %p322, %p323
      %p325 = pneg %p324
      // Predicated region
      $region9: #{net_forward.1} parent=5 // pred_check
        _
      $region10: #{net_forward.1} parent=5 // pred_check_branch
        %327 = sbr.rel (%p324) target = $region12
      $region11: #{net_forward.1} parent=5 // pred_region
        %s328 = ssub.s32 %s21, 1
        // Predicated region
        $region13: #{net_forward.1} parent=11 // pred_check
          %p329 = pneg %p120
        $region14: #{net_forward.1} parent=11 // pred_check_branch
          %331 = sbr.rel (%p329) target = $region16
        $region15: #{net_forward.1} parent=11 // pred_region
          _
        $region16: #{net_forward.1} parent=11 // pred_fallthru
          _
        // Predicated region
        $region17: #{net_forward.1} parent=11 // pred_check
          %p332 = pneg %p141
        $region18: #{net_forward.1} parent=11 // pred_check_branch
          %334 = sbr.rel (%p332) target = $region20
        $region19: #{net_forward.1} parent=11 // pred_region
          _
        $region20: #{net_forward.1} parent=11 // pred_fallthru
          _
        // Predicated region
        $region21: #{net_forward.1} parent=11 // pred_check
          %p335 = pneg %p162
        $region22: #{net_forward.1} parent=11 // pred_check_branch
          %337 = sbr.rel (%p335) target = $region24
        $region23: #{net_forward.1} parent=11 // pred_region
          _
        $region24: #{net_forward.1} parent=11 // pred_fallthru
          _
        // Predicated region
        $region25: #{net_forward.1} parent=11 // pred_check
          %p338 = pneg %p183
        $region26: #{net_forward.1} parent=11 // pred_check_branch
          %340 = sbr.rel (%p338) target = $region28
        $region27: #{net_forward.1} parent=11 // pred_region
          _
        $region28: #{net_forward.1} parent=11 // pred_fallthru
          _
        // Predicated region
        $region29: #{net_forward.1} parent=11 // pred_check
          %p341 = pneg %p204
        $region30: #{net_forward.1} parent=11 // pred_check_branch
          %343 = sbr.rel (%p341) target = $region32
        $region31: #{net_forward.1} parent=11 // pred_region
          _
        $region32: #{net_forward.1} parent=11 // pred_fallthru
          _
        // Predicated region
        $region33: #{net_forward.1} parent=11 // pred_check
          %p344 = pneg %p225
        $region34: #{net_forward.1} parent=11 // pred_check_branch
          %346 = sbr.rel (%p344) target = $region36
        $region35: #{net_forward.1} parent=11 // pred_region
          _
        $region36: #{net_forward.1} parent=11 // pred_fallthru
          _
        // Predicated region
        $region37: #{net_forward.1} parent=11 // pred_check
          %p347 = pneg %p246
        $region38: #{net_forward.1} parent=11 // pred_check_branch
          %349 = sbr.rel (%p347) target = $region40
        $region39: #{net_forward.1} parent=11 // pred_region
          _
        $region40: #{net_forward.1} parent=11 // pred_fallthru
          _
        // Predicated region
        $region41: #{net_forward.1} parent=11 // pred_check
          %p350 = pneg %p267
        $region42: #{net_forward.1} parent=11 // pred_check_branch
          %352 = sbr.rel (%p350) target = $region44
        $region43: #{net_forward.1} parent=11 // pred_region
          _
        $region44: #{net_forward.1} parent=11 // pred_fallthru
          _
        // Predicated region
        $region45: #{net_forward.1} parent=11 // pred_check
          %p353 = pneg %p288
        $region46: #{net_forward.1} parent=11 // pred_check_branch
          %355 = sbr.rel (%p353) target = $region48
        $region47: #{net_forward.1} parent=11 // pred_region
          _
        $region48: #{net_forward.1} parent=11 // pred_fallthru
          _
      $region12: #{net_forward.1} parent=5 // pred_fallthru
        _
      %p356 = scmp.lt.s32.totalorder %s21, 2
      // Predicated region
      $region49: #{net_forward.1} parent=5 // pred_check
        %p357 = pneg %p356
      $region50: #{net_forward.1} parent=5 // pred_check_branch
        %359 = sbr.rel (%p357) target = $region52
      $region51: #{net_forward.1} parent=5 // pred_region
        // Predicated region
        $region53: #{net_forward.1} parent=51 // pred_check
          %p360 = pneg %p41
        $region54: #{net_forward.1} parent=51 // pred_check_branch
          %362 = sbr.rel (%p360) target = $region56
        $region55: #{net_forward.1} parent=51 // pred_region
          %p363 = scmp.lt.s32.totalorder %s21, 1
          %s364 = scalar_select %p363, %s21, 1
          %s365 = smul.addr %s364, 2
          %s366 = smul.addr %s365, 8
          %s367 = scalar_lea.vmem %s0, %s366
        $region56: #{net_forward.1} parent=51 // pred_fallthru
          _
        // Predicated region
        $region57: #{net_forward.1} parent=51 // pred_check
          %p368 = pneg %p67
        $region58: #{net_forward.1} parent=51 // pred_check_branch
          %370 = sbr.rel (%p368) target = $region60
        $region59: #{net_forward.1} parent=51 // pred_region
          %p371 = scmp.lt.s32.totalorder %s21, 1
          %s372 = scalar_select %p371, %s21, 1
          %s373 = smul.addr %s372, 2
          %s374 = smul.addr %s373, 8
          %s375 = scalar_lea.vmem %s1, %s374
        $region60: #{net_forward.1} parent=51 // pred_fallthru
          _
        // Predicated region
        $region61: #{net_forward.1} parent=51 // pred_check
          %p376 = pneg %p93
        $region62: #{net_forward.1} parent=51 // pred_check_branch
          %378 = sbr.rel (%p376) target = $region64
        $region63: #{net_forward.1} parent=51 // pred_region
          %p379 = scmp.lt.s32.totalorder %s21, 1
          %s380 = scalar_select %p379, %s21, 1
          %s381 = smul.addr %s380, 2
          %s382 = smul.addr %s381, 8
          %s383 = scalar_lea.vmem %s2, %s382
        $region64: #{net_forward.1} parent=51 // pred_fallthru
          _
      $region52: #{net_forward.1} parent=5 // pred_fallthru
        _
      %p384 = scmp.le.s32.totalorder 1, %s21
      %p385 = scmp.lt.s32.totalorder %s21, 3
      %p386 = pnand %p384, %p385
      %p387 = pneg %p386
      // Predicated region
      $region65: #{net_forward.1} parent=5 // pred_check
        _
      $region66: #{net_forward.1} parent=5 // pred_check_branch
        %389 = sbr.rel (%p386) target = $region68
      $region67: #{net_forward.1} parent=5 // pred_region
        %s390 = ssub.s32 %s21, 1
        %p391 = scmp.lt.s32.totalorder %s26, 1
        %s392 = scalar_select %p391, %s26, 1
        %s393 = smul.addr %s392, 2
        %s394 = smul.addr %s393, 8
        %s395 = scalar_lea.vmem %s0, %s394
        %p396 = pneg %p47
        %p397 = pneg %p44
        %p398 = scmp.lt.s32.totalorder %s26, 1
        %s399 = scalar_select %p398, %s26, 1
        %s400 = smul.addr %s399, 2
        %s401 = smul.addr %s400, 8
        %s402 = scalar_lea.vmem %s1, %s401
        %p403 = pneg %p73
        %p404 = pneg %p70
        %p405 = scmp.lt.s32.totalorder %s26, 1
        %s406 = scalar_select %p405, %s26, 1
        %s407 = smul.addr %s406, 2
        %s408 = smul.addr %s407, 8
        %s409 = scalar_lea.vmem %s2, %s408
        %p410 = pneg %p99
        %p411 = pneg %p96
        %p412 = pneg %p120
        %p413 = pneg %p117
        %p414 = pneg %p141
        %p415 = pneg %p138
        %p416 = pneg %p162
        %p417 = pneg %p159
        %p418 = pneg %p183
        %p419 = pneg %p180
        %p420 = pneg %p204
        %p421 = pneg %p201
        %p422 = pneg %p225
        %p423 = pneg %p222
        %p424 = pneg %p246
        %p425 = pneg %p243
        %p426 = pneg %p267
        %p427 = pneg %p264
        %p428 = pneg %p288
        %p429 = pneg %p285
        %p430 = pneg %p314
        %p431 = pneg %p311
        %s432 = sand.u32 %s301, 1
        %s433 = scalar_lea.sflag [#allocation3], %s432
        %s434 = sand.u32 %s301, 1
        %s435 = scalar_lea.vmem [#allocation2], %s434
        %p436 = scmp.lt.s32.totalorder %s26, 1
        %s437 = scalar_select %p436, %s26, 1
        %s438 = smul.addr %s437, 2
        %s439 = smul.addr %s438, 8
        %s440 = scalar_lea.vmem %s0, %s439
        %p441 = scmp.lt.s32.totalorder %s26, 1
        %s442 = scalar_select %p441, %s26, 1
        %s443 = smul.addr %s442, 2
        %s444 = smul.addr %s443, 8
        %s445 = scalar_lea.vmem %s1, %s444
        %p446 = scmp.lt.s32.totalorder %s26, 1
        %s447 = scalar_select %p446, %s26, 1
        %s448 = smul.addr %s447, 2
        %s449 = smul.addr %s448, 8
        %s450 = scalar_lea.vmem %s2, %s449
        %v451 = vld [vmem:[%s440] sm:$0xff]
        %v452 = vld [vmem:[%s440 + $0x8] sm:$0xff]
        %v453 = vld [vmem:[%s445] sm:$0xff]
        %v454 = vld [vmem:[%s445 + $0x8] sm:$0xff]
        %v455 = vld [vmem:[%s450] sm:$0xff]
        %v456 = vld [vmem:[%s450 + $0x8] sm:$0xff]
        %v457 = vld [vmem:[%s3] sm:$0xff]
        %v458 = vld [vmem:[%s4] sm:$0x1]
        %vm459 = vcmask 130048
        %v461 = vsel %vm459, %v451, 0
        %v464 = vsel %vm459, %v452, 0
        %466 = vmatpush.msra.mxu0 0.0
        %467 = vmatpush.msra.mxu0 0.0
        %468 = vmatpush.msra.mxu0 0.0
        %469 = vmatpush.msra.mxu0 0.0
        %470 = vmatpush.msra.mxu0 0.0
        %471 = vmatpush.msra.mxu0 0.0
        %472 = vmatpush.msra.mxu0 0.0
        %473 = vmatpush.msra.mxu0 0.0
        %474 = vmatpush.msra.mxu0 0.0
        %475 = vmatpush.msra.mxu0 0.0
        %476 = vmatpush.msra.mxu0 0.0
        %477 = vmatpush.msra.mxu0 0.0
        %478 = vmatpush.msra.mxu0 0.0
        %479 = vmatpush.msra.mxu0 0.0
        %480 = vmatpush.msra.mxu0 %v454
        %481 = vmatpush.msra.mxu0 %v453
        %482 = vmatmul.f32.gmra.mxu0 %v461
        %v483 = vpop.f32.mrf.mxu0
        %v484 = vadd.f32 0.0, %v483
        %485 = vmatmul.f32.gmra.mxu0 %v464
        %v486 = vpop.f32.mrf.mxu0
        %v487 = vadd.f32 0.0, %v486
        %488 = vdwg.mxu0
        %v490 = vperm.slane %v458, 0
        %vm492 = vcmask 64512
        %v494 = vsel %vm492, %v484, 0
        %v497 = vsel %vm492, %v487, 0
        %499 = vmatpush.msra.mxu0 0.0
        %500 = vmatpush.msra.mxu0 0.0
        %501 = vmatpush.msra.mxu0 0.0
        %502 = vmatpush.msra.mxu0 0.0
        %503 = vmatpush.msra.mxu0 0.0
        %504 = vmatpush.msra.mxu0 0.0
        %505 = vmatpush.msra.mxu0 0.0
        %506 = vmatpush.msra.mxu0 0.0
        %507 = vmatpush.msra.mxu0 0.0
        %508 = vmatpush.msra.mxu0 0.0
        %509 = vmatpush.msra.mxu0 0.0
        %510 = vmatpush.msra.mxu0 0.0
        %511 = vmatpush.msra.mxu0 0.0
        %512 = vmatpush.msra.mxu0 0.0
        %513 = vmatpush.msra.mxu0 0.0
        %514 = vmatpush.msra.mxu0 %v457
        %515 = vmatmul.f32.gmra.mxu0 %v494
        %v516 = vpop.f32.mrf.mxu0
        %v517 = vadd.f32 %v490, %v516
        %518 = vmatmul.f32.gmra.mxu0 %v497
        %v519 = vpop.f32.mrf.mxu0
        %v520 = vadd.f32 %v490, %v519
        %521 = vdwg.mxu0
        %v522 = vmax.f32 %v517, 0.0
        %v523 = vmax.f32 %v520, 0.0
        %525 = vset.pattern.permute.xlu0 0
        %526 = vperm.xlu0 %525, %v455
        %v527 = vpop.permute.xlu0 %526
        %530 = vset.pattern.permute.xlu0 0
        %531 = vperm.xlu0 %530, %v456
        %v532 = vpop.permute.xlu0 %531
        %v534 = vmul.f32 %v522, %v527
        %v535 = vmul.f32 %v523, %v532
        %v536 = vld [vmem:[%s5] sm:$0xff]
        %v537 = vld [vmem:[%s5 + $0x8] sm:$0xff]
        %v538 = vld [vmem:[%s5 + $0x10] sm:$0xff]
        %v539 = vld [vmem:[%s5 + $0x18] sm:$0xff]
        %v540 = vld [vmem:[%s6] sm:$0x1]
        %541 = vmatpush.msra.mxu0 0.0
        %542 = vmatpush.msra.mxu0 0.0
        %543 = vmatpush.msra.mxu0 0.0
        %544 = vmatpush.msra.mxu0 0.0
        %545 = vmatpush.msra.mxu0 0.0
        %546 = vmatpush.msra.mxu0 0.0
        %547 = vmatpush.msra.mxu0 0.0
        %548 = vmatpush.msra.mxu0 0.0
        %549 = vmatpush.msra.mxu0 0.0
        %550 = vmatpush.msra.mxu0 0.0
        %551 = vmatpush.msra.mxu0 0.0
        %552 = vmatpush.msra.mxu0 0.0
        %553 = vmatpush.msra.mxu0 0.0
        %554 = vmatpush.msra.mxu0 0.0
        %555 = vmatpush.msra.mxu0 %v535
        %556 = vmatpush.msra.mxu0 %v534
        %557 = vmatmul.f32.gmra.mxu0 %v461
        %v558 = vpop.f32.mrf.mxu0
        %v559 = vadd.f32 0.0, %v558
        %560 = vmatmul.f32.gmra.mxu0 %v464
        %v561 = vpop.f32.mrf.mxu0
        %v562 = vadd.f32 0.0, %v561
        %563 = vdwg.mxu0
        %v565 = vperm.slane %v540, 0
        %vm567 = vcmask 261120
        %v569 = vsel %vm567, %v559, 0
        %v572 = vsel %vm567, %v562, 0
        %574 = vmatpush.msra.mxu0 0.0
        %575 = vmatpush.msra.mxu0 0.0
        %576 = vmatpush.msra.mxu0 0.0
        %577 = vmatpush.msra.mxu0 0.0
        %578 = vmatpush.msra.mxu0 0.0
        %579 = vmatpush.msra.mxu0 0.0
        %580 = vmatpush.msra.mxu0 0.0
        %581 = vmatpush.msra.mxu0 0.0
        %582 = vmatpush.msra.mxu0 0.0
        %583 = vmatpush.msra.mxu0 0.0
        %584 = vmatpush.msra.mxu0 0.0
        %585 = vmatpush.msra.mxu0 0.0
        %586 = vmatpush.msra.mxu0 %v539
        %587 = vmatpush.msra.mxu0 %v538
        %588 = vmatpush.msra.mxu0 %v537
        %589 = vmatpush.msra.mxu0 %v536
        %590 = vmatmul.f32.gmra.mxu0 %v569
        %v591 = vpop.f32.mrf.mxu0
        %v592 = vadd.f32 %v565, %v591
        %593 = vmatmul.f32.gmra.mxu0 %v572
        %v594 = vpop.f32.mrf.mxu0
        %v595 = vadd.f32 %v565, %v594
        %596 = vdwg.mxu0
        %v597 = vmax.f32 %v592, 0.0
        %v598 = vmax.f32 %v595, 0.0
        %v599 = vmul.f32 %v597, %v527
        %v600 = vmul.f32 %v598, %v532
        %v601 = vld [vmem:[%s7] sm:$0xff]
        %v602 = vld [vmem:[%s7 + $0x8] sm:$0xff]
        %v603 = vld [vmem:[%s7 + $0x10] sm:$0xff]
        %v604 = vld [vmem:[%s7 + $0x18] sm:$0xff]
        %v606 = vsel %vm567, %v599, 0
        %v609 = vsel %vm567, %v600, 0
        %611 = vmatpush.msra.mxu0 0.0
        %612 = vmatpush.msra.mxu0 0.0
        %613 = vmatpush.msra.mxu0 0.0
        %614 = vmatpush.msra.mxu0 0.0
        %615 = vmatpush.msra.mxu0 0.0
        %616 = vmatpush.msra.mxu0 0.0
        %617 = vmatpush.msra.mxu0 0.0
        %618 = vmatpush.msra.mxu0 0.0
        %619 = vmatpush.msra.mxu0 0.0
        %620 = vmatpush.msra.mxu0 0.0
        %621 = vmatpush.msra.mxu0 0.0
        %622 = vmatpush.msra.mxu0 0.0
        %623 = vmatpush.msra.mxu0 %v604
        %624 = vmatpush.msra.mxu0 %v603
        %625 = vmatpush.msra.mxu0 %v602
        %626 = vmatpush.msra.mxu0 %v601
        %627 = vmatmul.f32.gmra.mxu0 %v606
        %v628 = vpop.f32.mrf.mxu0
        %v629 = vadd.f32 0.0, %v628
        %630 = vmatmul.f32.gmra.mxu0 %v609
        %v631 = vpop.f32.mrf.mxu0
        %v632 = vadd.f32 0.0, %v631
        %633 = vdwg.mxu0
        %vm634 = vcmp.gt.f32.partialorder %v455, 0.0
        %vm635 = vcmp.gt.f32.partialorder %v456, 0.0
        %v636 = vsel %vm634, %v629, -1e+09
        %v637 = vsel %vm635, %v632, -1e+09
        %v638 = vlaneseq
        %v639 = vshrl.u32 %v638, 7
        %v640 = vadd.s32 %v639, 8
        %v641 = vlaneseq
        %v642 = vand.u32 %v641, 127
        %644 = vset.pattern.permute.xlu0 0
        %645 = vperm.xlu0 %644, %v636
        %v646 = vpop.permute.xlu0 %645
        %649 = vset.pattern.permute.xlu0 0
        %650 = vperm.xlu0 %649, %v637
        %v651 = vpop.permute.xlu0 %650
        %vm653 = vcmp.eq.s32.totalorder %v639, %v642
        %vm654 = vcmp.eq.s32.totalorder %v640, %v642
        %v655 = vsel %vm653, %v646, 0.0
        %v656 = vsel %vm654, %v651, 0.0
        %v658 = vsel %vm459, 1.0, 0
        %660 = vmatpush.msra.mxu0 0.0
        %661 = vmatpush.msra.mxu0 0.0
        %662 = vmatpush.msra.mxu0 0.0
        %663 = vmatpush.msra.mxu0 0.0
        %664 = vmatpush.msra.mxu0 0.0
        %665 = vmatpush.msra.mxu0 0.0
        %666 = vmatpush.msra.mxu0 0.0
        %667 = vmatpush.msra.mxu0 0.0
        %668 = vmatpush.msra.mxu0 0.0
        %669 = vmatpush.msra.mxu0 0.0
        %670 = vmatpush.msra.mxu0 0.0
        %671 = vmatpush.msra.mxu0 0.0
        %672 = vmatpush.msra.mxu0 0.0
        %673 = vmatpush.msra.mxu0 0.0
        %674 = vmatpush.msra.mxu0 %v656
        %675 = vmatpush.msra.mxu0 %v655
        %676 = vmatmul.f32.gmra.mxu0 %v658
        %v677 = vpop.f32.mrf.mxu0
        %v678 = vadd.f32 0.0, %v677
        %679 = vmatmul.f32.gmra.mxu0 %v658
        %v680 = vpop.f32.mrf.mxu0
        %v681 = vadd.f32 0.0, %v680
        %682 = vdwg.mxu0
        %vm683 = vcmp.ne.s32.totalorder %v639, %v642
        %vm684 = vcmp.ne.s32.totalorder %v640, %v642
        %vm685 = vcmp.gt.f32.partialorder %v646, %v678
        %vm686 = vcmp.gt.f32.partialorder %v651, %v681
        %vm687 = vcmp.eq.f32.partialorder %v646, %v678
        %vm688 = vcmp.eq.f32.partialorder %v651, %v681
        %vm689 = vcmp.lt.s32.totalorder %v639, %v642
        %vm690 = vcmp.lt.s32.totalorder %v640, %v642
        %vm691 = vmand %vm687, %vm689
        %vm692 = vmand %vm688, %vm690
        %vm693 = vmor %vm685, %vm691
        %vm694 = vmor %vm686, %vm692
        %vm695 = vmand %vm683, %vm693
        %vm696 = vmand %vm684, %vm694
        %v697 = vsel %vm695, 1.0, 0.0
        %v698 = vsel %vm696, 1.0, 0.0
        %v699 = vsel %vm459, %v697, 0.0
        %v700 = vsel %vm459, %v698, 0.0
        %v701 = vadd.f32 %v699, %v700
        %v702 = vrot.slane %v701, 4
        %v703 = vadd.f32 %v701, %v702
        %v704 = vrot.slane %v703, 2
        %v705 = vadd.f32 %v703, %v704
        %v706 = vrot.slane %v705, 1
        %v707 = vadd.f32 %v705, %v706
        %v708 = vcvt.s32.f32 %v639
        %vm709 = vcmp.eq.f32.partialorder %v707, %v708
        %v710 = vsel %vm709, 1.0, 0.0
        %v712 = vsel %vm459, %v710, 0
        %714 = vmatpush.msra.mxu0 0.0
        %715 = vmatpush.msra.mxu0 0.0
        %716 = vmatpush.msra.mxu0 0.0
        %717 = vmatpush.msra.mxu0 0.0
        %718 = vmatpush.msra.mxu0 0.0
        %719 = vmatpush.msra.mxu0 0.0
        %720 = vmatpush.msra.mxu0 0.0
        %721 = vmatpush.msra.mxu0 0.0
        %722 = vmatpush.msra.mxu0 0.0
        %723 = vmatpush.msra.mxu0 0.0
        %724 = vmatpush.msra.mxu0 0.0
        %725 = vmatpush.msra.mxu0 0.0
        %726 = vmatpush.msra.mxu0 0.0
        %727 = vmatpush.msra.mxu0 0.0
        %728 = vmatpush.msra.mxu0 %v637
        %729 = vmatpush.msra.mxu0 %v636
        %730 = vmatmul.f32.gmra.mxu0 %v712
        %v731 = vpop.f32.mrf.mxu0
        %v732 = vadd.f32 0.0, %v731
        %733 = vdwg.mxu0
        %v734 = vsub.f32 0.0, %v732
        %v735 = vmul.f32 %v734, 1.442695
        %v736 = vpow.pop %v735
        %v737 = vadd.f32 %v736, 1.0
        %v738 = vrcp.pop %v737
        %v739 = vmul.f32 %v737, %v738
        %v740 = vsub.f32 1.0, %v739
        %v741 = vmul.f32 %v738, %v740
        %v742 = vadd.f32 %v738, %v741
        %vm743 = vweird.f32 %v737
        %vm744 = vweird.f32 %v738
        %vm745 = vmor %vm743, %vm744
        %v746 = vsel %vm745, %v738, %v742
        %v747 = vand.u32 2147483647, %v737
        %vm748 = vcmp.eq.f32.partialorder %v747, 8.507059e+37
        %v749 = vand.u32 %v737, 2147483648
        %v750 = vor.u32 1.1754944e-38, %v749
        %v751 = vsel %vm748, %v750, %v746
        %v752 = vmul.f32 1.0, %v751
        %753 = vmatpush.msra.mxu0 0.0
        %754 = vmatpush.msra.mxu0 0.0
        %755 = vmatpush.msra.mxu0 0.0
        %756 = vmatpush.msra.mxu0 0.0
        %757 = vmatpush.msra.mxu0 0.0
        %758 = vmatpush.msra.mxu0 0.0
        %759 = vmatpush.msra.mxu0 0.0
        %760 = vmatpush.msra.mxu0 0.0
        %761 = vmatpush.msra.mxu0 0.0
        %762 = vmatpush.msra.mxu0 0.0
        %763 = vmatpush.msra.mxu0 0.0
        %764 = vmatpush.msra.mxu0 0.0
        %765 = vmatpush.msra.mxu0 0.0
        %766 = vmatpush.msra.mxu0 0.0
        %767 = vmatpush.msra.mxu0 %v600
        %768 = vmatpush.msra.mxu0 %v599
        %769 = vmatmul.f32.gmra.mxu0 %v712
        %v770 = vpop.f32.mrf.mxu0
        %v771 = vadd.f32 0.0, %v770
        %772 = vdwg.mxu0
        %774 = vset.pattern.permute.xlu0 0
        %775 = vperm.xlu0 %774, %v752
        %v776 = vpop.permute.xlu0 %775
        %v778 = vmul.f32 %v771, %v776
        %779 = vmatpush.msra.mxu0 0.0
        %780 = vmatpush.msra.mxu0 0.0
        %781 = vmatpush.msra.mxu0 0.0
        %782 = vmatpush.msra.mxu0 0.0
        %783 = vmatpush.msra.mxu0 0.0
        %784 = vmatpush.msra.mxu0 0.0
        %785 = vmatpush.msra.mxu0 0.0
        %786 = vmatpush.msra.mxu0 0.0
        %787 = vmatpush.msra.mxu0 0.0
        %788 = vmatpush.msra.mxu0 0.0
        %789 = vmatpush.msra.mxu0 0.0
        %790 = vmatpush.msra.mxu0 0.0
        %791 = vmatpush.msra.mxu0 0.0
        %792 = vmatpush.msra.mxu0 0.0
        %793 = vmatpush.msra.mxu0 %v452
        %794 = vmatpush.msra.mxu0 %v451
        %795 = vmatmul.f32.gmra.mxu0 %v712
        %v796 = vpop.f32.mrf.mxu0
        %v797 = vadd.f32 0.0, %v796
        %798 = vdwg.mxu0
        %v800 = vsel %vm459, %v797, 0
        %802 = vmatpush.xpose.msra.mxu0 0.0
        %803 = vmatpush.xpose.msra.mxu0 0.0
        %804 = vmatpush.xpose.msra.mxu0 0.0
        %805 = vmatpush.xpose.msra.mxu0 0.0
        %806 = vmatpush.xpose.msra.mxu0 0.0
        %807 = vmatpush.xpose.msra.mxu0 0.0
        %808 = vmatpush.xpose.msra.mxu0 0.0
        %809 = vmatpush.xpose.msra.mxu0 0.0
        %810 = vmatpush.xpose.msra.mxu0 0.0
        %811 = vmatpush.xpose.msra.mxu0 0.0
        %812 = vmatpush.xpose.msra.mxu0 0.0
        %813 = vmatpush.xpose.msra.mxu0 0.0
        %814 = vmatpush.xpose.msra.mxu0 0.0
        %815 = vmatpush.xpose.msra.mxu0 0.0
        %816 = vmatpush.xpose.msra.mxu0 0.0
        %817 = vmatpush.xpose.msra.mxu0 %v712
        %818 = vmatmul.f32.gmra.mxu0 %v800
        %v819 = vpop.f32.mrf.mxu0
        %v820 = vadd.f32 0.0, %v819
        %821 = vdwg.mxu0
        %822 = vmatpush.msra.mxu0 0.0
        %823 = vmatpush.msra.mxu0 0.0
        %824 = vmatpush.msra.mxu0 0.0
        %825 = vmatpush.msra.mxu0 0.0
        %826 = vmatpush.msra.mxu0 0.0
        %827 = vmatpush.msra.mxu0 0.0
        %828 = vmatpush.msra.mxu0 0.0
        %829 = vmatpush.msra.mxu0 0.0
        %830 = vmatpush.msra.mxu0 0.0
        %831 = vmatpush.msra.mxu0 0.0
        %832 = vmatpush.msra.mxu0 0.0
        %833 = vmatpush.msra.mxu0 0.0
        %834 = vmatpush.msra.mxu0 0.0
        %835 = vmatpush.msra.mxu0 0.0
        %836 = vmatpush.msra.mxu0 %v456
        %837 = vmatpush.msra.mxu0 %v455
        %838 = vmatmul.f32.gmra.mxu0 %v712
        %v839 = vpop.f32.mrf.mxu0
        %v840 = vadd.f32 0.0, %v839
        %841 = vdwg.mxu0
        %s842 = scalar_lea.vmem %s5, 32
        %v843 = vld [vmem:[%s842] sm:$0xff]
        %v844 = vld [vmem:[%s842 + $0x8] sm:$0xff]
        %v845 = vld [vmem:[%s842 + $0x10] sm:$0xff]
        %v846 = vld [vmem:[%s842 + $0x18] sm:$0xff]
        %s847 = scalar_lea.vmem %s6, 1
        %v848 = vld [vmem:[%s847] sm:$0x1]
        %v850 = vsel %vm492, %v820, 0
        %852 = vmatpush.msra.mxu0 0.0
        %853 = vmatpush.msra.mxu0 0.0
        %854 = vmatpush.msra.mxu0 0.0
        %855 = vmatpush.msra.mxu0 0.0
        %856 = vmatpush.msra.mxu0 0.0
        %857 = vmatpush.msra.mxu0 0.0
        %858 = vmatpush.msra.mxu0 0.0
        %859 = vmatpush.msra.mxu0 0.0
        %860 = vmatpush.msra.mxu0 0.0
        %861 = vmatpush.msra.mxu0 0.0
        %862 = vmatpush.msra.mxu0 0.0
        %863 = vmatpush.msra.mxu0 0.0
        %864 = vmatpush.msra.mxu0 0.0
        %865 = vmatpush.msra.mxu0 0.0
        %866 = vmatpush.msra.mxu0 0.0
        %867 = vmatpush.msra.mxu0 %v778
        %868 = vmatmul.f32.gmra.mxu0 %v850
        %v869 = vpop.f32.mrf.mxu0
        %v870 = vadd.f32 0.0, %v869
        %871 = vdwg.mxu0
        %v873 = vperm.slane %v848, 0
        %v876 = vsel %vm567, %v870, 0
        %878 = vmatpush.msra.mxu0 0.0
        %879 = vmatpush.msra.mxu0 0.0
        %880 = vmatpush.msra.mxu0 0.0
        %881 = vmatpush.msra.mxu0 0.0
        %882 = vmatpush.msra.mxu0 0.0
        %883 = vmatpush.msra.mxu0 0.0
        %884 = vmatpush.msra.mxu0 0.0
        %885 = vmatpush.msra.mxu0 0.0
        %886 = vmatpush.msra.mxu0 0.0
        %887 = vmatpush.msra.mxu0 0.0
        %888 = vmatpush.msra.mxu0 0.0
        %889 = vmatpush.msra.mxu0 0.0
        %890 = vmatpush.msra.mxu0 %v846
        %891 = vmatpush.msra.mxu0 %v845
        %892 = vmatpush.msra.mxu0 %v844
        %893 = vmatpush.msra.mxu0 %v843
        %894 = vmatmul.f32.gmra.mxu0 %v876
        %v895 = vpop.f32.mrf.mxu0
        %v896 = vadd.f32 %v873, %v895
        %897 = vdwg.mxu0
        %v898 = vmax.f32 %v896, 0.0
        %900 = vset.pattern.permute.xlu0 0
        %901 = vperm.xlu0 %900, %v840
        %v902 = vpop.permute.xlu0 %901
        %v904 = vmul.f32 %v898, %v902
        %s905 = scalar_lea.vmem %s7, 32
        %v906 = vld [vmem:[%s905] sm:$0xff]
        %v907 = vld [vmem:[%s905 + $0x8] sm:$0xff]
        %v908 = vld [vmem:[%s905 + $0x10] sm:$0xff]
        %v909 = vld [vmem:[%s905 + $0x18] sm:$0xff]
        %v911 = vsel %vm567, %v904, 0
        %913 = vmatpush.msra.mxu0 0.0
        %914 = vmatpush.msra.mxu0 0.0
        %915 = vmatpush.msra.mxu0 0.0
        %916 = vmatpush.msra.mxu0 0.0
        %917 = vmatpush.msra.mxu0 0.0
        %918 = vmatpush.msra.mxu0 0.0
        %919 = vmatpush.msra.mxu0 0.0
        %920 = vmatpush.msra.mxu0 0.0
        %921 = vmatpush.msra.mxu0 0.0
        %922 = vmatpush.msra.mxu0 0.0
        %923 = vmatpush.msra.mxu0 0.0
        %924 = vmatpush.msra.mxu0 0.0
        %925 = vmatpush.msra.mxu0 %v909
        %926 = vmatpush.msra.mxu0 %v908
        %927 = vmatpush.msra.mxu0 %v907
        %928 = vmatpush.msra.mxu0 %v906
        %929 = vmatmul.f32.gmra.mxu0 %v911
        %v930 = vpop.f32.mrf.mxu0
        %v931 = vadd.f32 0.0, %v930
        %932 = vdwg.mxu0
        %vm933 = vcmp.gt.f32.partialorder %v840, 0.0
        %v934 = vsel %vm933, %v931, -1e+09
        %936 = vset.pattern.permute.xlu0 0
        %937 = vperm.xlu0 %936, %v934
        %v938 = vpop.permute.xlu0 %937
        %v940 = vsel %vm653, %v938, 0.0
        %v941 = vsel %vm492, 1.0, 0
        %943 = vmatpush.msra.mxu0 0.0
        %944 = vmatpush.msra.mxu0 0.0
        %945 = vmatpush.msra.mxu0 0.0
        %946 = vmatpush.msra.mxu0 0.0
        %947 = vmatpush.msra.mxu0 0.0
        %948 = vmatpush.msra.mxu0 0.0
        %949 = vmatpush.msra.mxu0 0.0
        %950 = vmatpush.msra.mxu0 0.0
        %951 = vmatpush.msra.mxu0 0.0
        %952 = vmatpush.msra.mxu0 0.0
        %953 = vmatpush.msra.mxu0 0.0
        %954 = vmatpush.msra.mxu0 0.0
        %955 = vmatpush.msra.mxu0 0.0
        %956 = vmatpush.msra.mxu0 0.0
        %957 = vmatpush.msra.mxu0 0.0
        %958 = vmatpush.msra.mxu0 %v940
        %959 = vmatmul.f32.gmra.mxu0 %v941
        %v960 = vpop.f32.mrf.mxu0
        %v961 = vadd.f32 0.0, %v960
        %962 = vdwg.mxu0
        %vm963 = vcmp.gt.f32.partialorder %v938, %v961
        %vm964 = vcmp.eq.f32.partialorder %v938, %v961
        %vm965 = vmand %vm964, %vm689
        %vm966 = vmor %vm963, %vm965
        %vm967 = vmand %vm683, %vm966
        %v968 = vsel %vm967, 1.0, 0.0
        %v969 = vsel %vm492, %v968, 0.0
        %v970 = vrot.slane %v969, 4
        %v971 = vadd.f32 %v969, %v970
        %v972 = vrot.slane %v971, 2
        %v973 = vadd.f32 %v971, %v972
        %v974 = vrot.slane %v973, 1
        %v975 = vadd.f32 %v973, %v974
        %vm976 = vcmp.eq.f32.partialorder %v975, %v708
        %v977 = vsel %vm976, 1.0, 0.0
        %v979 = vsel %vm492, %v977, 0
        %981 = vmatpush.msra.mxu0 0.0
        %982 = vmatpush.msra.mxu0 0.0
        %983 = vmatpush.msra.mxu0 0.0
        %984 = vmatpush.msra.mxu0 0.0
        %985 = vmatpush.msra.mxu0 0.0
        %986 = vmatpush.msra.mxu0 0.0
        %987 = vmatpush.msra.mxu0 0.0
        %988 = vmatpush.msra.mxu0 0.0
        %989 = vmatpush.msra.mxu0 0.0
        %990 = vmatpush.msra.mxu0 0.0
        %991 = vmatpush.msra.mxu0 0.0
        %992 = vmatpush.msra.mxu0 0.0
        %993 = vmatpush.msra.mxu0 0.0
        %994 = vmatpush.msra.mxu0 0.0
        %995 = vmatpush.msra.mxu0 0.0
        %996 = vmatpush.msra.mxu0 %v934
        %997 = vmatmul.f32.gmra.mxu0 %v979
        %v998 = vpop.f32.mrf.mxu0
        %v999 = vadd.f32 0.0, %v998
        %1000 = vdwg.mxu0
        %v1001 = vsub.f32 0.0, %v999
        %v1002 = vmul.f32 %v1001, 1.442695
        %v1003 = vpow.pop %v1002
        %v1004 = vadd.f32 %v1003, 1.0
        %v1005 = vrcp.pop %v1004
        %v1006 = vmul.f32 %v1004, %v1005
        %v1007 = vsub.f32 1.0, %v1006
        %v1008 = vmul.f32 %v1005, %v1007
        %v1009 = vadd.f32 %v1005, %v1008
        %vm1010 = vweird.f32 %v1004
        %vm1011 = vweird.f32 %v1005
        %vm1012 = vmor %vm1010, %vm1011
        %v1013 = vsel %vm1012, %v1005, %v1009
        %v1014 = vand.u32 2147483647, %v1004
        %vm1015 = vcmp.eq.f32.partialorder %v1014, 8.507059e+37
        %v1016 = vand.u32 %v1004, 2147483648
        %v1017 = vor.u32 1.1754944e-38, %v1016
        %v1018 = vsel %vm1015, %v1017, %v1013
        %v1019 = vmul.f32 1.0, %v1018
        %1020 = vmatpush.msra.mxu0 0.0
        %1021 = vmatpush.msra.mxu0 0.0
        %1022 = vmatpush.msra.mxu0 0.0
        %1023 = vmatpush.msra.mxu0 0.0
        %1024 = vmatpush.msra.mxu0 0.0
        %1025 = vmatpush.msra.mxu0 0.0
        %1026 = vmatpush.msra.mxu0 0.0
        %1027 = vmatpush.msra.mxu0 0.0
        %1028 = vmatpush.msra.mxu0 0.0
        %1029 = vmatpush.msra.mxu0 0.0
        %1030 = vmatpush.msra.mxu0 0.0
        %1031 = vmatpush.msra.mxu0 0.0
        %1032 = vmatpush.msra.mxu0 0.0
        %1033 = vmatpush.msra.mxu0 0.0
        %1034 = vmatpush.msra.mxu0 0.0
        %1035 = vmatpush.msra.mxu0 %v904
        %1036 = vmatmul.f32.gmra.mxu0 %v979
        %v1037 = vpop.f32.mrf.mxu0
        %v1038 = vadd.f32 0.0, %v1037
        %1039 = vdwg.mxu0
        %1041 = vset.pattern.permute.xlu0 0
        %1042 = vperm.xlu0 %1041, %v1019
        %v1043 = vpop.permute.xlu0 %1042
        %v1045 = vmul.f32 %v1038, %v1043
        %vm1046 = vcmask 257024
        %v1047 = vsel %vm1046, %v1045, 0.0
        %v1048 = vrot.slane %v1047, 4
        %v1049 = vadd.f32 %v1047, %v1048
        %v1050 = vrot.slane %v1049, 2
        %v1051 = vadd.f32 %v1049, %v1050
        %v1052 = vrot.slane %v1051, 1
        %v1053 = vadd.f32 %v1051, %v1052
        %v1054 = vrcp.pop 4.0
        %v1055 = vmul.f32 4.0, %v1054
        %v1056 = vsub.f32 1.0, %v1055
        %v1057 = vmul.f32 %v1054, %v1056
        %v1058 = vadd.f32 %v1054, %v1057
        %vm1059 = vweird.f32 %v1054
        %v1060 = vsel %vm1059, %v1054, %v1058
        %v1061 = vmul.f32 %v1053, %v1060
        %v1062 = vld [vmem:[%s8] sm:$0xff]
        %v1063 = vld [vmem:[%s8 + $0x8] sm:$0xff]
        %v1064 = vld [vmem:[%s8 + $0x10] sm:$0xff]
        %v1065 = vld [vmem:[%s8 + $0x18] sm:$0xff]
        %v1066 = vld [vmem:[%s9] sm:$0x1]
        %v1068 = vsel %vm567, %v1061, 0
        %1070 = vmatpush.msra.mxu0 0.0
        %1071 = vmatpush.msra.mxu0 0.0
        %1072 = vmatpush.msra.mxu0 0.0
        %1073 = vmatpush.msra.mxu0 0.0
        %1074 = vmatpush.msra.mxu0 0.0
        %1075 = vmatpush.msra.mxu0 0.0
        %1076 = vmatpush.msra.mxu0 0.0
        %1077 = vmatpush.msra.mxu0 0.0
        %1078 = vmatpush.msra.mxu0 0.0
        %1079 = vmatpush.msra.mxu0 0.0
        %1080 = vmatpush.msra.mxu0 0.0
        %1081 = vmatpush.msra.mxu0 0.0
        %1082 = vmatpush.msra.mxu0 %v1065
        %1083 = vmatpush.msra.mxu0 %v1064
        %1084 = vmatpush.msra.mxu0 %v1063
        %1085 = vmatpush.msra.mxu0 %v1062
        %1086 = vmatmul.f32.gmra.mxu0 %v1068
        %v1087 = vpop.f32.mrf.mxu0
        %v1088 = vadd.f32 %v1066, %v1087
        %1089 = vdwg.mxu0
        %v1090 = vmax.f32 %v1088, 0.0
        %v1091 = vld [vmem:[%s10] sm:$0xff]
        %v1092 = vld [vmem:[%s10 + $0x8] sm:$0xff]
        %v1093 = vld [vmem:[%s10 + $0x10] sm:$0xff]
        %v1094 = vld [vmem:[%s10 + $0x18] sm:$0xff]
        %v1095 = vld [vmem:[%s11] sm:$0x1]
        %v1097 = vsel %vm567, %v1090, 0
        %1099 = vmatpush.msra.mxu0 0.0
        %1100 = vmatpush.msra.mxu0 0.0
        %1101 = vmatpush.msra.mxu0 0.0
        %1102 = vmatpush.msra.mxu0 0.0
        %1103 = vmatpush.msra.mxu0 0.0
        %1104 = vmatpush.msra.mxu0 0.0
        %1105 = vmatpush.msra.mxu0 0.0
        %1106 = vmatpush.msra.mxu0 0.0
        %1107 = vmatpush.msra.mxu0 0.0
        %1108 = vmatpush.msra.mxu0 0.0
        %1109 = vmatpush.msra.mxu0 0.0
        %1110 = vmatpush.msra.mxu0 0.0
        %1111 = vmatpush.msra.mxu0 %v1094
        %1112 = vmatpush.msra.mxu0 %v1093
        %1113 = vmatpush.msra.mxu0 %v1092
        %1114 = vmatpush.msra.mxu0 %v1091
        %1115 = vmatmul.f32.gmra.mxu0 %v1097
        %v1116 = vpop.f32.mrf.mxu0
        %v1117 = vadd.f32 %v1095, %v1116
        %1118 = vdwg.mxu0
        %vm1119 = vcmask 16384
        %v1120 = vsel %vm1119, %v1117, -inf
        %1121 = vmax.xlane.f32.xlu0 %v1120
        %v1122 = vpop.xlane.xlu0 %1121
        %v1123 = vsub.f32 %v1117, %v1122
        %v1124 = vmul.f32 %v1123, 1.442695
        %v1125 = vpow.pop %v1124
        %v1126 = vsel %vm1119, %v1125, 0.0
        %1127 = vadd.xlane.f32.xlu0 %v1126
        %v1128 = vpop.xlane.xlu0 %1127
        %v1129 = vlog2.pop %v1128
        %v1130 = vmul.f32 %v1129, 0.6931472
        %v1131 = vsub.f32 %v1123, %v1130
        %1132 = vst.msk [vmem:[%s435] sm:$0x1] %vm1119, %v1131
        %s1133 = sand.u32 %s301, 1
        %s1134 = scalar_lea.sflag [#allocation3], %s1133
        %s1135 = sand.u32 %s301, 1
        %s1136 = scalar_lea.vmem [#allocation2], %s1135
        // Predicated region
        $region69: #{net_forward.1} parent=67 // pred_check
          %p1137 = pneg %p311
        $region70: #{net_forward.1} parent=67 // pred_check_branch
          %1139 = sbr.rel (%p1137) target = $region72
        $region71: #{net_forward.1} parent=67 // pred_region
          %1141 = vsyncadd %s1134, 0
          %s1142 = scalar_lea.hbm %s12, %s26
          %s1144 = sshll.u32 %s1136, 4
          %s1145 = int_to_ptr.vmem [resolvable:$true] %s1144
          %s1146 = sshll.u32 %s1142, 4
          %s1147 = int_to_ptr.hbm [resolvable:$true] %s1146
          %1149 = dma.vmem_to_hbm [thread:$0]  %s1145, 16, %s1147, %s1134
        $region72: #{net_forward.1} parent=67 // pred_fallthru
          _
      $region68: #{net_forward.1} parent=5 // pred_fallthru
        _
      %p1150 = scmp.le.s32.totalorder 2, %s21
      // Predicated region
      $region73: #{net_forward.1} parent=5 // pred_check
        %p1151 = pneg %p1150
      $region74: #{net_forward.1} parent=5 // pred_check_branch
        %1153 = sbr.rel (%p1151) target = $region76
      $region75: #{net_forward.1} parent=5 // pred_region
        %s1154 = ssub.s32 %s21, 2
        // Predicated region
        $region77: #{net_forward.1} parent=75 // pred_check
          %p1155 = pneg %p317
        $region78: #{net_forward.1} parent=75 // pred_check_branch
          %1157 = sbr.rel (%p1155) target = $region80
        $region79: #{net_forward.1} parent=75 // pred_region
          %s1158 = sand.u32 %s302, 1
          %s1159 = scalar_lea.sflag [#allocation3], %s1158
          %s1160 = sand.u32 %s302, 1
          %s1161 = scalar_lea.vmem [#allocation2], %s1160
          %1163 = dma.done %s1159, 16
        $region80: #{net_forward.1} parent=75 // pred_fallthru
          _
      $region76: #{net_forward.1} parent=5 // pred_fallthru
        _
    $region6: #{net_forward.1} parent=1 // loop_footer
      %s25 = sadd.s32 1, %s21
    $region7: #{net_forward.1} parent=1 // loop_footer_branch
      %20 = sbr.rel target = $region3
    $region8: #{net_forward.1} parent=1 // loop_exit
      _
    %1164 = vsyncpa [#allocation3], 1
    %s1165 = scalar_lea.sflag [#allocation3], 1
    %1166 = vsyncpa %s1165, 1

</llo_original>
